<compile_context>
chip_gen: v7x
topology: tpu7x:2x2x1
jax: 0.10.0
libtpu: 0.0.40
codegen_flags: <defaults>
</compile_context>

<pallas_src>
import functools

import jax
import jax.numpy as jnp
from jax import lax
from jax.experimental import pallas as pl
from jax.experimental.pallas import tpu as pltpu


def _decoder_kernel(num_hidden, x_ref, *refs):
    """refs = (w0, b0, ..., w_{L-2}, b_{L-2}, w_last_row, b_last, o_ref).

    Hidden-layer weights w_l are (in_l, out_l) bf16, biases (1, out_l) f32.
    The final layer's weight is passed as a (1, hidden) bf16 row and its bias
    as (1, 1) f32 so the result lands directly in lane-major (1, tile_n) layout.
    """
    o_ref = refs[-1]
    params = refs[:-1]

    h = x_ref[...]                                        # (tile_n, d_in) f32
    for l in range(num_hidden):
        w = params[2 * l][...]                            # (in, out)  bf16
        b = params[2 * l + 1][...]                        # (1, out)   f32
        acc = jnp.dot(h.astype(jnp.bfloat16), w,
                      preferred_element_type=jnp.float32)
        h = jnp.maximum(acc + b, 0.0)                     # bias + ReLU in f32

    w_last = params[2 * num_hidden][...]                  # (1, hidden) bf16
    b_last = params[2 * num_hidden + 1][...]              # (1, 1)      f32
    # (1, hidden) x (tile_n, hidden), contracting the feature axis of both
    # -> (1, tile_n): SDF values already in lane-major row layout.
    sdf = lax.dot_general(
        w_last, h.astype(jnp.bfloat16),
        dimension_numbers=(((1,), (1,)), ((), ())),
        preferred_element_type=jnp.float32) + b_last
    o_ref[...] = jnp.tanh(sdf).astype(o_ref.dtype)        # final self.th = Tanh


def decoder_forward(x, weights, biases, *, tile_n=256):
    """x: (N, D_in) f32; weights[l]: (in_l, out_l); biases[l]: (out_l,)."""
    assert tile_n % 128 == 0, "tile_n must be a multiple of 128 (lane-dense output)"
    N, d_in = x.shape
    L = len(weights)
    assert weights[-1].shape[1] == 1, "final layer must have out_dim == 1"

    num_tiles = pl.cdiv(N, tile_n)
    n_pad = num_tiles * tile_n
    if n_pad != N:
        x = jnp.pad(x, ((0, n_pad - N), (0, 0)))

    vmem_spec = pl.BlockSpec(memory_space=pltpu.MemorySpace.VMEM)  # resident, single-buffered
    in_specs = [pl.BlockSpec((tile_n, d_in), lambda i: (i, 0))]
    args = [x]
    param_bytes = 0
    for l in range(L - 1):
        w = weights[l].astype(jnp.bfloat16)               # (in, out)
        b = biases[l].reshape(1, -1).astype(jnp.float32)  # (1, out)
        args += [w, b]
        in_specs += [vmem_spec, vmem_spec]
        param_bytes += w.size * 2 + b.size * 4
    w_last = weights[-1].astype(jnp.bfloat16).T           # (1, hidden)
    b_last = biases[-1].reshape(1, 1).astype(jnp.float32)  # (1, 1)
    args += [w_last, b_last]
    in_specs += [vmem_spec, vmem_spec]
    param_bytes += w_last.size * 2 + b_last.size * 4

    out_specs = pl.BlockSpec((1, tile_n), lambda i: (0, i))
    out_shape = jax.ShapeDtypeStruct((1, n_pad), x.dtype)

    # VMEM budget: resident params + double-buffered (tile_n, d_in) input tiles
    # + double-buffered (sublane-padded) output rows + activation headroom.
    max_width = max(max(w.shape) for w in weights)
    vmem_est = (param_bytes
                + 2 * tile_n * d_in * 4
                + 2 * 8 * tile_n * 4
                + 4 * tile_n * max_width * 4)
    vmem_limit = int(min(56 * 1024 * 1024, max(16 * 1024 * 1024, 2 * vmem_est)))

    flops = int(2 * n_pad * sum(int(w.shape[0]) * int(w.shape[1]) for w in weights))
    bytes_accessed = int(n_pad * d_in * 4 + n_pad * 4 + param_bytes)
    cost = pl.CostEstimate(flops=flops, transcendentals=int(n_pad),
                           bytes_accessed=bytes_accessed)

    kernel = functools.partial(_decoder_kernel, L - 1)
    out = pl.pallas_call(
        kernel,
        out_shape=out_shape,
        grid_spec=pltpu.PrefetchScalarGridSpec(
            num_scalar_prefetch=0,
            grid=(num_tiles,),
            in_specs=in_specs,
            out_specs=out_specs,
        ),
        compiler_params=pltpu.CompilerParams(
            dimension_semantics=("parallel",),
            vmem_limit_bytes=vmem_limit,
        ),
        cost_estimate=cost,
    )(*args)

    return out[0, :N].reshape(N, 1)


def make_decoder_params(key, latent_size, hidden_dims):
    """Deterministic init matching the module's layer-shape logic
    (defaults: latent_in=(), xyz_in_all=None -> out_dim = dims[layer+1])."""
    dims = [latent_size + 3] + list(hidden_dims) + [1]
    num_layers = len(dims)
    weights, biases = [], []
    for layer in range(num_layers - 1):
        in_dim, out_dim = dims[layer], dims[layer + 1]
        key, wk, bk = jax.random.split(key, 3)
        bound = 1.0 / jnp.sqrt(in_dim)
        # stored as (in_dim, out_dim) — transposed vs. torch's (out, in)
        w = jax.random.uniform(wk, (in_dim, out_dim), jnp.float32, -bound, bound)
        b = jax.random.uniform(bk, (out_dim,), jnp.float32, -bound, bound)
        weights.append(w)
        biases.append(b)
    return weights, biases


def decoder_reference_f32(x, weights, biases):
    """Pure-JAX f32 reference of the module's forward pass."""
    h = x
    L = len(weights)
    for l in range(L):
        h = h @ weights[l] + biases[l]
        if l < L - 1:
            h = jnp.maximum(h, 0.0)
    return jnp.tanh(h)


def decoder_reference_bf16(x, weights, biases):
    """Mirrors the kernel's bf16-operand / f32-accumulate arithmetic."""
    h = x.astype(jnp.float32)
    L = len(weights)
    for l in range(L):
        acc = jnp.dot(h.astype(jnp.bfloat16), weights[l].astype(jnp.bfloat16),
                      preferred_element_type=jnp.float32)
        h = acc + biases[l].astype(jnp.float32)
        if l < L - 1:
            h = jnp.maximum(h, 0.0)
    return jnp.tanh(h)


if __name__ == "__main__":
    # Small-but-consistent shapes: latent_size=29 -> D_in = 32, 8 hidden layers
    # of width 32, final output dim 1 (SDF value).  N = 1000 sample points
    # (deliberately not a multiple of tile_n to exercise the padding path).
    latent_size = 29
    hidden_dims = [32] * 8
    N = 1000

    key = jax.random.PRNGKey(0)
    key, pkey, xkey = jax.random.split(key, 3)
    weights, biases = make_decoder_params(pkey, latent_size, hidden_dims)
    x = jax.random.normal(xkey, (N, latent_size + 3), jnp.float32)

    out = decoder_forward(x, weights, biases, tile_n=256)
    out = jax.block_until_ready(out)
    assert out.shape == (N, 1), out.shape

    ref_bf16 = decoder_reference_bf16(x, weights, biases)   # same arithmetic as kernel
    assert jnp.allclose(out, ref_bf16, atol=1e-3, rtol=1e-3), "mismatch vs bf16 reference"

    ref_f32 = decoder_reference_f32(x, weights, biases)      # loose sanity vs f32 module math
    assert jnp.allclose(out, ref_f32, atol=1e-1), "mismatch vs f32 reference"

    print("KERNEL_OK")
</pallas_src>

<mosaic_0001>
module attributes {stable_mosaic.version = 11 : i64} {
  func.func @_decoder_kernel(%arg0: i32, %arg1: memref<256x32xf32, #tpu.memory_space<vmem>>, %arg2: memref<32x32xbf16, #tpu.memory_space<vmem>>, %arg3: memref<1x32xf32, #tpu.memory_space<vmem>>, %arg4: memref<32x32xbf16, #tpu.memory_space<vmem>>, %arg5: memref<1x32xf32, #tpu.memory_space<vmem>>, %arg6: memref<32x32xbf16, #tpu.memory_space<vmem>>, %arg7: memref<1x32xf32, #tpu.memory_space<vmem>>, %arg8: memref<32x32xbf16, #tpu.memory_space<vmem>>, %arg9: memref<1x32xf32, #tpu.memory_space<vmem>>, %arg10: memref<32x32xbf16, #tpu.memory_space<vmem>>, %arg11: memref<1x32xf32, #tpu.memory_space<vmem>>, %arg12: memref<32x32xbf16, #tpu.memory_space<vmem>>, %arg13: memref<1x32xf32, #tpu.memory_space<vmem>>, %arg14: memref<32x32xbf16, #tpu.memory_space<vmem>>, %arg15: memref<1x32xf32, #tpu.memory_space<vmem>>, %arg16: memref<32x32xbf16, #tpu.memory_space<vmem>>, %arg17: memref<1x32xf32, #tpu.memory_space<vmem>>, %arg18: memref<1x32xbf16, #tpu.memory_space<vmem>>, %arg19: memref<1x1xf32, #tpu.memory_space<vmem>>, %arg20: memref<1x256xf32, #tpu.memory_space<vmem>>) attributes {dimension_semantics = [#tpu.dimension_semantics<parallel>], iteration_bounds = array<i64: 4>, scalar_prefetch = 0 : i64, scratch_operands = 0 : i64, tpu.core_type = #tpu.core_type<tc>, window_params = [{transform_indices = @transform_0, window_bounds = array<i64: 256, 32>}, {pipeline_mode = #tpu.pipeline_mode<synchronous>, transform_indices = @transform_1, window_bounds = array<i64: 32, 32>}, {pipeline_mode = #tpu.pipeline_mode<synchronous>, transform_indices = @transform_2, window_bounds = array<i64: 1, 32>}, {pipeline_mode = #tpu.pipeline_mode<synchronous>, transform_indices = @transform_3, window_bounds = array<i64: 32, 32>}, {pipeline_mode = #tpu.pipeline_mode<synchronous>, transform_indices = @transform_4, window_bounds = array<i64: 1, 32>}, {pipeline_mode = #tpu.pipeline_mode<synchronous>, transform_indices = @transform_5, window_bounds = array<i64: 32, 32>}, {pipeline_mode = #tpu.pipeline_mode<synchronous>, transform_indices = @transform_6, window_bounds = array<i64: 1, 32>}, {pipeline_mode = #tpu.pipeline_mode<synchronous>, transform_indices = @transform_7, window_bounds = array<i64: 32, 32>}, {pipeline_mode = #tpu.pipeline_mode<synchronous>, transform_indices = @transform_8, window_bounds = array<i64: 1, 32>}, {pipeline_mode = #tpu.pipeline_mode<synchronous>, transform_indices = @transform_9, window_bounds = array<i64: 32, 32>}, {pipeline_mode = #tpu.pipeline_mode<synchronous>, transform_indices = @transform_10, window_bounds = array<i64: 1, 32>}, {pipeline_mode = #tpu.pipeline_mode<synchronous>, transform_indices = @transform_11, window_bounds = array<i64: 32, 32>}, {pipeline_mode = #tpu.pipeline_mode<synchronous>, transform_indices = @transform_12, window_bounds = array<i64: 1, 32>}, {pipeline_mode = #tpu.pipeline_mode<synchronous>, transform_indices = @transform_13, window_bounds = array<i64: 32, 32>}, {pipeline_mode = #tpu.pipeline_mode<synchronous>, transform_indices = @transform_14, window_bounds = array<i64: 1, 32>}, {pipeline_mode = #tpu.pipeline_mode<synchronous>, transform_indices = @transform_15, window_bounds = array<i64: 32, 32>}, {pipeline_mode = #tpu.pipeline_mode<synchronous>, transform_indices = @transform_16, window_bounds = array<i64: 1, 32>}, {pipeline_mode = #tpu.pipeline_mode<synchronous>, transform_indices = @transform_17, window_bounds = array<i64: 1, 32>}, {pipeline_mode = #tpu.pipeline_mode<synchronous>, transform_indices = @transform_18, window_bounds = array<i64: 1, 1>}, {transform_indices = @transform_19, window_bounds = array<i64: 1, 256>}]} {
    %c0 = arith.constant 0 : index
    %c0_0 = arith.constant 0 : index
    %0 = vector.load %arg1[%c0, %c0_0] : memref<256x32xf32, #tpu.memory_space<vmem>>, vector<256x32xf32>
    %c0_1 = arith.constant 0 : index
    %c0_2 = arith.constant 0 : index
    %1 = vector.load %arg2[%c0_1, %c0_2] : memref<32x32xbf16, #tpu.memory_space<vmem>>, vector<32x32xbf16>
    %c0_3 = arith.constant 0 : index
    %c0_4 = arith.constant 0 : index
    %2 = vector.load %arg3[%c0_3, %c0_4] : memref<1x32xf32, #tpu.memory_space<vmem>>, vector<1x32xf32>
    %3 = arith.truncf %0 : vector<256x32xf32> to vector<256x32xbf16>
    %cst = arith.constant dense<0.000000e+00> : vector<256x32xf32>
    %4 = tpu.matmul %3, %1, %cst {dimension_numbers = #tpu.dot_dimension_numbers<[1], [0], [0], [1], [0, 0, 1, 1], [], []>} : vector<256x32xbf16>, vector<32x32xbf16>, vector<256x32xf32> -> vector<256x32xf32>
    %5 = vector.broadcast %2 : vector<1x32xf32> to vector<256x32xf32>
    %6 = arith.addf %4, %5 : vector<256x32xf32>
    %cst_5 = arith.constant 0.000000e+00 : f32
    %7 = vector.broadcast %cst_5 : f32 to vector<256x32xf32>
    %8 = arith.maximumf %6, %7 : vector<256x32xf32>
    %c0_6 = arith.constant 0 : index
    %c0_7 = arith.constant 0 : index
    %9 = vector.load %arg4[%c0_6, %c0_7] : memref<32x32xbf16, #tpu.memory_space<vmem>>, vector<32x32xbf16>
    %c0_8 = arith.constant 0 : index
    %c0_9 = arith.constant 0 : index
    %10 = vector.load %arg5[%c0_8, %c0_9] : memref<1x32xf32, #tpu.memory_space<vmem>>, vector<1x32xf32>
    %11 = arith.truncf %8 : vector<256x32xf32> to vector<256x32xbf16>
    %cst_10 = arith.constant dense<0.000000e+00> : vector<256x32xf32>
    %12 = tpu.matmul %11, %9, %cst_10 {dimension_numbers = #tpu.dot_dimension_numbers<[1], [0], [0], [1], [0, 0, 1, 1], [], []>} : vector<256x32xbf16>, vector<32x32xbf16>, vector<256x32xf32> -> vector<256x32xf32>
    %13 = vector.broadcast %10 : vector<1x32xf32> to vector<256x32xf32>
    %14 = arith.addf %12, %13 : vector<256x32xf32>
    %cst_11 = arith.constant 0.000000e+00 : f32
    %15 = vector.broadcast %cst_11 : f32 to vector<256x32xf32>
    %16 = arith.maximumf %14, %15 : vector<256x32xf32>
    %c0_12 = arith.constant 0 : index
    %c0_13 = arith.constant 0 : index
    %17 = vector.load %arg6[%c0_12, %c0_13] : memref<32x32xbf16, #tpu.memory_space<vmem>>, vector<32x32xbf16>
    %c0_14 = arith.constant 0 : index
    %c0_15 = arith.constant 0 : index
    %18 = vector.load %arg7[%c0_14, %c0_15] : memref<1x32xf32, #tpu.memory_space<vmem>>, vector<1x32xf32>
    %19 = arith.truncf %16 : vector<256x32xf32> to vector<256x32xbf16>
    %cst_16 = arith.constant dense<0.000000e+00> : vector<256x32xf32>
    %20 = tpu.matmul %19, %17, %cst_16 {dimension_numbers = #tpu.dot_dimension_numbers<[1], [0], [0], [1], [0, 0, 1, 1], [], []>} : vector<256x32xbf16>, vector<32x32xbf16>, vector<256x32xf32> -> vector<256x32xf32>
    %21 = vector.broadcast %18 : vector<1x32xf32> to vector<256x32xf32>
    %22 = arith.addf %20, %21 : vector<256x32xf32>
    %cst_17 = arith.constant 0.000000e+00 : f32
    %23 = vector.broadcast %cst_17 : f32 to vector<256x32xf32>
    %24 = arith.maximumf %22, %23 : vector<256x32xf32>
    %c0_18 = arith.constant 0 : index
    %c0_19 = arith.constant 0 : index
    %25 = vector.load %arg8[%c0_18, %c0_19] : memref<32x32xbf16, #tpu.memory_space<vmem>>, vector<32x32xbf16>
    %c0_20 = arith.constant 0 : index
    %c0_21 = arith.constant 0 : index
    %26 = vector.load %arg9[%c0_20, %c0_21] : memref<1x32xf32, #tpu.memory_space<vmem>>, vector<1x32xf32>
    %27 = arith.truncf %24 : vector<256x32xf32> to vector<256x32xbf16>
    %cst_22 = arith.constant dense<0.000000e+00> : vector<256x32xf32>
    %28 = tpu.matmul %27, %25, %cst_22 {dimension_numbers = #tpu.dot_dimension_numbers<[1], [0], [0], [1], [0, 0, 1, 1], [], []>} : vector<256x32xbf16>, vector<32x32xbf16>, vector<256x32xf32> -> vector<256x32xf32>
    %29 = vector.broadcast %26 : vector<1x32xf32> to vector<256x32xf32>
    %30 = arith.addf %28, %29 : vector<256x32xf32>
    %cst_23 = arith.constant 0.000000e+00 : f32
    %31 = vector.broadcast %cst_23 : f32 to vector<256x32xf32>
    %32 = arith.maximumf %30, %31 : vector<256x32xf32>
    %c0_24 = arith.constant 0 : index
    %c0_25 = arith.constant 0 : index
    %33 = vector.load %arg10[%c0_24, %c0_25] : memref<32x32xbf16, #tpu.memory_space<vmem>>, vector<32x32xbf16>
    %c0_26 = arith.constant 0 : index
    %c0_27 = arith.constant 0 : index
    %34 = vector.load %arg11[%c0_26, %c0_27] : memref<1x32xf32, #tpu.memory_space<vmem>>, vector<1x32xf32>
    %35 = arith.truncf %32 : vector<256x32xf32> to vector<256x32xbf16>
    %cst_28 = arith.constant dense<0.000000e+00> : vector<256x32xf32>
    %36 = tpu.matmul %35, %33, %cst_28 {dimension_numbers = #tpu.dot_dimension_numbers<[1], [0], [0], [1], [0, 0, 1, 1], [], []>} : vector<256x32xbf16>, vector<32x32xbf16>, vector<256x32xf32> -> vector<256x32xf32>
    %37 = vector.broadcast %34 : vector<1x32xf32> to vector<256x32xf32>
    %38 = arith.addf %36, %37 : vector<256x32xf32>
    %cst_29 = arith.constant 0.000000e+00 : f32
    %39 = vector.broadcast %cst_29 : f32 to vector<256x32xf32>
    %40 = arith.maximumf %38, %39 : vector<256x32xf32>
    %c0_30 = arith.constant 0 : index
    %c0_31 = arith.constant 0 : index
    %41 = vector.load %arg12[%c0_30, %c0_31] : memref<32x32xbf16, #tpu.memory_space<vmem>>, vector<32x32xbf16>
    %c0_32 = arith.constant 0 : index
    %c0_33 = arith.constant 0 : index
    %42 = vector.load %arg13[%c0_32, %c0_33] : memref<1x32xf32, #tpu.memory_space<vmem>>, vector<1x32xf32>
    %43 = arith.truncf %40 : vector<256x32xf32> to vector<256x32xbf16>
    %cst_34 = arith.constant dense<0.000000e+00> : vector<256x32xf32>
    %44 = tpu.matmul %43, %41, %cst_34 {dimension_numbers = #tpu.dot_dimension_numbers<[1], [0], [0], [1], [0, 0, 1, 1], [], []>} : vector<256x32xbf16>, vector<32x32xbf16>, vector<256x32xf32> -> vector<256x32xf32>
    %45 = vector.broadcast %42 : vector<1x32xf32> to vector<256x32xf32>
    %46 = arith.addf %44, %45 : vector<256x32xf32>
    %cst_35 = arith.constant 0.000000e+00 : f32
    %47 = vector.broadcast %cst_35 : f32 to vector<256x32xf32>
    %48 = arith.maximumf %46, %47 : vector<256x32xf32>
    %c0_36 = arith.constant 0 : index
    %c0_37 = arith.constant 0 : index
    %49 = vector.load %arg14[%c0_36, %c0_37] : memref<32x32xbf16, #tpu.memory_space<vmem>>, vector<32x32xbf16>
    %c0_38 = arith.constant 0 : index
    %c0_39 = arith.constant 0 : index
    %50 = vector.load %arg15[%c0_38, %c0_39] : memref<1x32xf32, #tpu.memory_space<vmem>>, vector<1x32xf32>
    %51 = arith.truncf %48 : vector<256x32xf32> to vector<256x32xbf16>
    %cst_40 = arith.constant dense<0.000000e+00> : vector<256x32xf32>
    %52 = tpu.matmul %51, %49, %cst_40 {dimension_numbers = #tpu.dot_dimension_numbers<[1], [0], [0], [1], [0, 0, 1, 1], [], []>} : vector<256x32xbf16>, vector<32x32xbf16>, vector<256x32xf32> -> vector<256x32xf32>
    %53 = vector.broadcast %50 : vector<1x32xf32> to vector<256x32xf32>
    %54 = arith.addf %52, %53 : vector<256x32xf32>
    %cst_41 = arith.constant 0.000000e+00 : f32
    %55 = vector.broadcast %cst_41 : f32 to vector<256x32xf32>
    %56 = arith.maximumf %54, %55 : vector<256x32xf32>
    %c0_42 = arith.constant 0 : index
    %c0_43 = arith.constant 0 : index
    %57 = vector.load %arg16[%c0_42, %c0_43] : memref<32x32xbf16, #tpu.memory_space<vmem>>, vector<32x32xbf16>
    %c0_44 = arith.constant 0 : index
    %c0_45 = arith.constant 0 : index
    %58 = vector.load %arg17[%c0_44, %c0_45] : memref<1x32xf32, #tpu.memory_space<vmem>>, vector<1x32xf32>
    %59 = arith.truncf %56 : vector<256x32xf32> to vector<256x32xbf16>
    %cst_46 = arith.constant dense<0.000000e+00> : vector<256x32xf32>
    %60 = tpu.matmul %59, %57, %cst_46 {dimension_numbers = #tpu.dot_dimension_numbers<[1], [0], [0], [1], [0, 0, 1, 1], [], []>} : vector<256x32xbf16>, vector<32x32xbf16>, vector<256x32xf32> -> vector<256x32xf32>
    %61 = vector.broadcast %58 : vector<1x32xf32> to vector<256x32xf32>
    %62 = arith.addf %60, %61 : vector<256x32xf32>
    %cst_47 = arith.constant 0.000000e+00 : f32
    %63 = vector.broadcast %cst_47 : f32 to vector<256x32xf32>
    %64 = arith.maximumf %62, %63 : vector<256x32xf32>
    %c0_48 = arith.constant 0 : index
    %c0_49 = arith.constant 0 : index
    %65 = vector.load %arg18[%c0_48, %c0_49] : memref<1x32xbf16, #tpu.memory_space<vmem>>, vector<1x32xbf16>
    %c0_50 = arith.constant 0 : index
    %c0_51 = arith.constant 0 : index
    %66 = vector.load %arg19[%c0_50, %c0_51] : memref<1x1xf32, #tpu.memory_space<vmem>>, vector<1x1xf32>
    %67 = arith.truncf %64 : vector<256x32xf32> to vector<256x32xbf16>
    %cst_52 = arith.constant dense<0.000000e+00> : vector<1x256xf32>
    %68 = tpu.matmul %65, %67, %cst_52 {dimension_numbers = #tpu.dot_dimension_numbers<[1], [1], [0], [0], [0, 0, 1, 0], [], []>} : vector<1x32xbf16>, vector<256x32xbf16>, vector<1x256xf32> -> vector<1x256xf32>
    %69 = vector.broadcast %66 : vector<1x1xf32> to vector<1x256xf32>
    %70 = arith.addf %68, %69 : vector<1x256xf32>
    %71 = math.tanh %70 : vector<1x256xf32>
    %c0_53 = arith.constant 0 : index
    %c0_54 = arith.constant 0 : index
    %72 = vector.load %arg20[%c0_53, %c0_54] : memref<1x256xf32, #tpu.memory_space<vmem>>, vector<1x256xf32>
    tpu.vector_store %arg20[%c0_53, %c0_54], %71 {strides = array<i32>} : memref<1x256xf32, #tpu.memory_space<vmem>>, vector<1x256xf32>,
    return
  }
  func.func @transform_0(%arg0: i32) -> (i32, i32) {
    %c0_i32 = arith.constant 0 : i32
    %c0_i32_0 = arith.constant 0 : i32
    return %arg0, %c0_i32 : i32, i32
  }
  func.func @transform_1(%arg0: i32) -> (i32, i32) {
    %c0_i32 = arith.constant 0 : i32
    %c0_i32_0 = arith.constant 0 : i32
    %c0_i32_1 = arith.constant 0 : i32
    return %c0_i32, %c0_i32_0 : i32, i32
  }
  func.func @transform_2(%arg0: i32) -> (i32, i32) {
    %c0_i32 = arith.constant 0 : i32
    %c0_i32_0 = arith.constant 0 : i32
    %c0_i32_1 = arith.constant 0 : i32
    return %c0_i32, %c0_i32_0 : i32, i32
  }
  func.func @transform_3(%arg0: i32) -> (i32, i32) {
    %c0_i32 = arith.constant 0 : i32
    %c0_i32_0 = arith.constant 0 : i32
    %c0_i32_1 = arith.constant 0 : i32
    return %c0_i32, %c0_i32_0 : i32, i32
  }
  func.func @transform_4(%arg0: i32) -> (i32, i32) {
    %c0_i32 = arith.constant 0 : i32
    %c0_i32_0 = arith.constant 0 : i32
    %c0_i32_1 = arith.constant 0 : i32
    return %c0_i32, %c0_i32_0 : i32, i32
  }
  func.func @transform_5(%arg0: i32) -> (i32, i32) {
    %c0_i32 = arith.constant 0 : i32
    %c0_i32_0 = arith.constant 0 : i32
    %c0_i32_1 = arith.constant 0 : i32
    return %c0_i32, %c0_i32_0 : i32, i32
  }
  func.func @transform_6(%arg0: i32) -> (i32, i32) {
    %c0_i32 = arith.constant 0 : i32
    %c0_i32_0 = arith.constant 0 : i32
    %c0_i32_1 = arith.constant 0 : i32
    return %c0_i32, %c0_i32_0 : i32, i32
  }
  func.func @transform_7(%arg0: i32) -> (i32, i32) {
    %c0_i32 = arith.constant 0 : i32
    %c0_i32_0 = arith.constant 0 : i32
    %c0_i32_1 = arith.constant 0 : i32
    return %c0_i32, %c0_i32_0 : i32, i32
  }
  func.func @transform_8(%arg0: i32) -> (i32, i32) {
    %c0_i32 = arith.constant 0 : i32
    %c0_i32_0 = arith.constant 0 : i32
    %c0_i32_1 = arith.constant 0 : i32
    return %c0_i32, %c0_i32_0 : i32, i32
  }
  func.func @transform_9(%arg0: i32) -> (i32, i32) {
    %c0_i32 = arith.constant 0 : i32
    %c0_i32_0 = arith.constant 0 : i32
    %c0_i32_1 = arith.constant 0 : i32
    return %c0_i32, %c0_i32_0 : i32, i32
  }
  func.func @transform_10(%arg0: i32) -> (i32, i32) {
    %c0_i32 = arith.constant 0 : i32
    %c0_i32_0 = arith.constant 0 : i32
    %c0_i32_1 = arith.constant 0 : i32
    return %c0_i32, %c0_i32_0 : i32, i32
  }
  func.func @transform_11(%arg0: i32) -> (i32, i32) {
    %c0_i32 = arith.constant 0 : i32
    %c0_i32_0 = arith.constant 0 : i32
    %c0_i32_1 = arith.constant 0 : i32
    return %c0_i32, %c0_i32_0 : i32, i32
  }
  func.func @transform_12(%arg0: i32) -> (i32, i32) {
    %c0_i32 = arith.constant 0 : i32
    %c0_i32_0 = arith.constant 0 : i32
    %c0_i32_1 = arith.constant 0 : i32
    return %c0_i32, %c0_i32_0 : i32, i32
  }
  func.func @transform_13(%arg0: i32) -> (i32, i32) {
    %c0_i32 = arith.constant 0 : i32
    %c0_i32_0 = arith.constant 0 : i32
    %c0_i32_1 = arith.constant 0 : i32
    return %c0_i32, %c0_i32_0 : i32, i32
  }
  func.func @transform_14(%arg0: i32) -> (i32, i32) {
    %c0_i32 = arith.constant 0 : i32
    %c0_i32_0 = arith.constant 0 : i32
    %c0_i32_1 = arith.constant 0 : i32
    return %c0_i32, %c0_i32_0 : i32, i32
  }
  func.func @transform_15(%arg0: i32) -> (i32, i32) {
    %c0_i32 = arith.constant 0 : i32
    %c0_i32_0 = arith.constant 0 : i32
    %c0_i32_1 = arith.constant 0 : i32
    return %c0_i32, %c0_i32_0 : i32, i32
  }
  func.func @transform_16(%arg0: i32) -> (i32, i32) {
    %c0_i32 = arith.constant 0 : i32
    %c0_i32_0 = arith.constant 0 : i32
    %c0_i32_1 = arith.constant 0 : i32
    return %c0_i32, %c0_i32_0 : i32, i32
  }
  func.func @transform_17(%arg0: i32) -> (i32, i32) {
    %c0_i32 = arith.constant 0 : i32
    %c0_i32_0 = arith.constant 0 : i32
    %c0_i32_1 = arith.constant 0 : i32
    return %c0_i32, %c0_i32_0 : i32, i32
  }
  func.func @transform_18(%arg0: i32) -> (i32, i32) {
    %c0_i32 = arith.constant 0 : i32
    %c0_i32_0 = arith.constant 0 : i32
    %c0_i32_1 = arith.constant 0 : i32
    return %c0_i32, %c0_i32_0 : i32, i32
  }
  func.func @transform_19(%arg0: i32) -> (i32, i32) {
    %c0_i32 = arith.constant 0 : i32
    %c0_i32_0 = arith.constant 0 : i32
    return %c0_i32, %arg0 : i32, i32
  }
}

</mosaic_0001>

<llo_original>
// kernel: tpu_custom_call.1
$region0: #{tpu_custom_call.1}
  #allocation0 [shape = 'u32[]', space=smem, size = 0x4, offset = 0x4, fixed_abs, tag = 'smem constant byte address 0x4 - core index']
  #allocation1 [shape = 'u32[144,128]{1,0:T(1,128)}', space=vmem, size = 0x12000, scoped, tag = 'internal scratch']
  #allocation2 [shape = 'f32[1,1]{1,0:T(1,128)S(1)}', space=vmem, size = 0x200, scoped, tag = 'scoped memory for tpu_custom_call.1']
  %s0 = inlined_call_operand.vmem [shape: f32[1024,32], index: 0, kind: input, shape index: {}]
  %s1 = inlined_call_operand.vmem [shape: bf16[32,32], index: 1, kind: input, shape index: {}]
  %s2 = inlined_call_operand.vmem [shape: f32[1,32], index: 2, kind: input, shape index: {}]
  %s3 = inlined_call_operand.vmem [shape: bf16[32,32], index: 3, kind: input, shape index: {}]
  %s4 = inlined_call_operand.vmem [shape: f32[1,32], index: 4, kind: input, shape index: {}]
  %s5 = inlined_call_operand.vmem [shape: bf16[32,32], index: 5, kind: input, shape index: {}]
  %s6 = inlined_call_operand.vmem [shape: f32[1,32], index: 6, kind: input, shape index: {}]
  %s7 = inlined_call_operand.vmem [shape: bf16[32,32], index: 7, kind: input, shape index: {}]
  %s8 = inlined_call_operand.vmem [shape: f32[1,32], index: 8, kind: input, shape index: {}]
  %s9 = inlined_call_operand.vmem [shape: bf16[32,32], index: 9, kind: input, shape index: {}]
  %s10 = inlined_call_operand.vmem [shape: f32[1,32], index: 10, kind: input, shape index: {}]
  %s11 = inlined_call_operand.vmem [shape: bf16[32,32], index: 11, kind: input, shape index: {}]
  %s12 = inlined_call_operand.vmem [shape: f32[1,32], index: 12, kind: input, shape index: {}]
  %s13 = inlined_call_operand.vmem [shape: bf16[32,32], index: 13, kind: input, shape index: {}]
  %s14 = inlined_call_operand.vmem [shape: f32[1,32], index: 14, kind: input, shape index: {}]
  %s15 = inlined_call_operand.vmem [shape: bf16[32,32], index: 15, kind: input, shape index: {}]
  %s16 = inlined_call_operand.vmem [shape: f32[1,32], index: 16, kind: input, shape index: {}]
  %s17 = inlined_call_operand.vmem [shape: bf16[1,32], index: 17, kind: input, shape index: {}]
  %s18 = inlined_call_operand.<no memory space> [shape: f32[1,1], index: 18, kind: input, shape index: {}]
  %s19 = inlined_call_operand.hbm [shape: f32[1,1024], index: 19, kind: output, shape index: {}]
  %s20 = sld [smem:[#allocation0]]
  $region109: #{tpu_custom_call.1} parent=0
    _
  %s22 = ssub.s32 1, %s20
  %s23 = scalar_select 0, %s22, %s20
  %v24 = vstv %s18
  %25 = vst [vmem:[#allocation2] sm:$0x1] %v24
  $region1: #{tpu_custom_call.1} parent=0
    #allocation3 [shape = 'u8[2048]{0}', space=vmem, size = 0x800, scoped, tag = 'output window, operand 0']
    #allocation4 [shape = 's32[2]{0}', space=sflag, size = 0x8, scoped, tag = 'scoped memory for tpu_custom_call.1']
    %26 = vsyncpa [#allocation4], 0
    %s27 = scalar_lea.sflag [#allocation4], 1
    %28 = vsyncpa %s27, 0
    loop: start=0, step=1, limit=6
    $region2: #{tpu_custom_call.1} parent=1 // loop_pre_header
      _
    $region3: #{tpu_custom_call.1} parent=1 // loop_header
      %s30 = sphi 0, %s34
      %p31 = scmp.ge.s32.totalorder %s30, 6
      %s40 = sphi 0, %s42
      %s43 = sphi 0, %s40
      %s44 = sphi 0, %s43
      %s60 = sphi 0, %s44
      %s64 = sphi 0, %s64
      %s66 = sphi 0, %s64
      %s67 = sphi 0, %s66
      %s81 = sphi 0, %s67
      %s85 = sphi 0, %s85
      %s87 = sphi 0, %s85
      %s88 = sphi 0, %s87
      %s102 = sphi 0, %s88
      %s106 = sphi 0, %s106
      %s108 = sphi 0, %s106
      %s109 = sphi 0, %s108
      %s123 = sphi 0, %s109
      %s127 = sphi 0, %s127
      %s129 = sphi 0, %s127
      %s130 = sphi 0, %s129
      %s144 = sphi 0, %s130
      %s148 = sphi 0, %s148
      %s150 = sphi 0, %s148
      %s151 = sphi 0, %s150
      %s165 = sphi 0, %s151
      %s169 = sphi 0, %s169
      %s171 = sphi 0, %s169
      %s172 = sphi 0, %s171
      %s186 = sphi 0, %s172
      %s190 = sphi 0, %s190
      %s192 = sphi 0, %s190
      %s193 = sphi 0, %s192
      %s207 = sphi 0, %s193
      %s211 = sphi 0, %s211
      %s213 = sphi 0, %s211
      %s214 = sphi 0, %s213
      %s228 = sphi 0, %s214
      %s232 = sphi 0, %s232
      %s234 = sphi 0, %s232
      %s235 = sphi 0, %s234
      %s249 = sphi 0, %s235
      %s253 = sphi 0, %s253
      %s255 = sphi 0, %s253
      %s256 = sphi 0, %s255
      %s270 = sphi 0, %s256
      %s274 = sphi 0, %s274
      %s276 = sphi 0, %s274
      %s277 = sphi 0, %s276
      %s291 = sphi 0, %s277
      %s295 = sphi 0, %s295
      %s297 = sphi 0, %s295
      %s298 = sphi 0, %s297
      %s312 = sphi 0, %s298
      %s316 = sphi 0, %s316
      %s318 = sphi 0, %s316
      %s319 = sphi 0, %s318
      %s333 = sphi 0, %s319
      %s337 = sphi 0, %s337
      %s339 = sphi 0, %s337
      %s340 = sphi 0, %s339
      %s354 = sphi 0, %s340
      %s358 = sphi 0, %s358
      %s360 = sphi 0, %s358
      %s361 = sphi 0, %s360
      %s375 = sphi 0, %s361
      %s379 = sphi 0, %s379
      %s381 = sphi 0, %s379
      %s382 = sphi 0, %s381
      %s396 = sphi 0, %s382
      %s400 = sphi 0, %s400
      %s402 = sphi 0, %s400
      %s403 = sphi 0, %s402
      %s417 = sphi 0, %s403
      %s421 = sphi 0, %s421
      %s423 = sphi 0, %s421
      %s424 = sphi 0, %s423
      %s438 = sphi 0, %s424
      %s444 = sphi 0, %s446
      %s447 = sphi 0, %s444
      %s448 = sphi 0, %s447
      %s464 = sphi 0, %s448
    $region4: #{tpu_custom_call.1} parent=1 // loop_header_branch
      %33 = sbr.rel (%p31) target = $region8
    $region5: #{tpu_custom_call.1} parent=1 // loop_body
      %s35 = ssub.s32 %s30, 1
      %s36 = ssub.s32 %s30, 2
      %s37 = sadd.s32 %s30, 1
      %s38 = ssub.s32 %s30, %s37
      %p39 = scmp.eq.s32.totalorder %s38, 0
      %s41 = sadd.s32 %s40, 1
      %s42 = scalar_select %p39, %s40, %s41
      %p45 = pneg %p39
      %p46 = scmp.eq.s32.totalorder %s30, 3
      %p47 = por %p45, %p46
      %p48 = scmp.ne.s32.totalorder %s40, %s43
      %p49 = scmp.eq.s32.totalorder %s30, 0
      %p50 = por %p48, %p49
      %p51 = scmp.ne.s32.totalorder %s40, %s43
      %p52 = scmp.eq.s32.totalorder %s35, 3
      %p53 = por %p51, %p52
      %p54 = scmp.ne.s32.totalorder %s43, %s44
      %p55 = scmp.eq.s32.totalorder %s35, 0
      %p56 = por %p54, %p55
      %p57 = scmp.ne.s32.totalorder %s43, %s44
      %p58 = scmp.eq.s32.totalorder %s36, 3
      %p59 = por %p57, %p58
      %p61 = scmp.ne.s32.totalorder %s44, %s60
      %p62 = scmp.eq.s32.totalorder %s36, 0
      %p63 = por %p61, %p62
      %s65 = sadd.s32 %s64, 1
      %p68 = scmp.eq.s32.totalorder %s30, 3
      %p69 = scmp.ne.s32.totalorder %s64, %s66
      %p70 = scmp.eq.s32.totalorder %s30, 0
      %p71 = por %p69, %p70
      %p72 = scmp.ne.s32.totalorder %s64, %s66
      %p73 = scmp.eq.s32.totalorder %s35, 3
      %p74 = por %p72, %p73
      %p75 = scmp.ne.s32.totalorder %s66, %s67
      %p76 = scmp.eq.s32.totalorder %s35, 0
      %p77 = por %p75, %p76
      %p78 = scmp.ne.s32.totalorder %s66, %s67
      %p79 = scmp.eq.s32.totalorder %s36, 3
      %p80 = por %p78, %p79
      %p82 = scmp.ne.s32.totalorder %s67, %s81
      %p83 = scmp.eq.s32.totalorder %s36, 0
      %p84 = por %p82, %p83
      %s86 = sadd.s32 %s85, 1
      %p89 = scmp.eq.s32.totalorder %s30, 3
      %p90 = scmp.ne.s32.totalorder %s85, %s87
      %p91 = scmp.eq.s32.totalorder %s30, 0
      %p92 = por %p90, %p91
      %p93 = scmp.ne.s32.totalorder %s85, %s87
      %p94 = scmp.eq.s32.totalorder %s35, 3
      %p95 = por %p93, %p94
      %p96 = scmp.ne.s32.totalorder %s87, %s88
      %p97 = scmp.eq.s32.totalorder %s35, 0
      %p98 = por %p96, %p97
      %p99 = scmp.ne.s32.totalorder %s87, %s88
      %p100 = scmp.eq.s32.totalorder %s36, 3
      %p101 = por %p99, %p100
      %p103 = scmp.ne.s32.totalorder %s88, %s102
      %p104 = scmp.eq.s32.totalorder %s36, 0
      %p105 = por %p103, %p104
      %s107 = sadd.s32 %s106, 1
      %p110 = scmp.eq.s32.totalorder %s30, 3
      %p111 = scmp.ne.s32.totalorder %s106, %s108
      %p112 = scmp.eq.s32.totalorder %s30, 0
      %p113 = por %p111, %p112
      %p114 = scmp.ne.s32.totalorder %s106, %s108
      %p115 = scmp.eq.s32.totalorder %s35, 3
      %p116 = por %p114, %p115
      %p117 = scmp.ne.s32.totalorder %s108, %s109
      %p118 = scmp.eq.s32.totalorder %s35, 0
      %p119 = por %p117, %p118
      %p120 = scmp.ne.s32.totalorder %s108, %s109
      %p121 = scmp.eq.s32.totalorder %s36, 3
      %p122 = por %p120, %p121
      %p124 = scmp.ne.s32.totalorder %s109, %s123
      %p125 = scmp.eq.s32.totalorder %s36, 0
      %p126 = por %p124, %p125
      %s128 = sadd.s32 %s127, 1
      %p131 = scmp.eq.s32.totalorder %s30, 3
      %p132 = scmp.ne.s32.totalorder %s127, %s129
      %p133 = scmp.eq.s32.totalorder %s30, 0
      %p134 = por %p132, %p133
      %p135 = scmp.ne.s32.totalorder %s127, %s129
      %p136 = scmp.eq.s32.totalorder %s35, 3
      %p137 = por %p135, %p136
      %p138 = scmp.ne.s32.totalorder %s129, %s130
      %p139 = scmp.eq.s32.totalorder %s35, 0
      %p140 = por %p138, %p139
      %p141 = scmp.ne.s32.totalorder %s129, %s130
      %p142 = scmp.eq.s32.totalorder %s36, 3
      %p143 = por %p141, %p142
      %p145 = scmp.ne.s32.totalorder %s130, %s144
      %p146 = scmp.eq.s32.totalorder %s36, 0
      %p147 = por %p145, %p146
      %s149 = sadd.s32 %s148, 1
      %p152 = scmp.eq.s32.totalorder %s30, 3
      %p153 = scmp.ne.s32.totalorder %s148, %s150
      %p154 = scmp.eq.s32.totalorder %s30, 0
      %p155 = por %p153, %p154
      %p156 = scmp.ne.s32.totalorder %s148, %s150
      %p157 = scmp.eq.s32.totalorder %s35, 3
      %p158 = por %p156, %p157
      %p159 = scmp.ne.s32.totalorder %s150, %s151
      %p160 = scmp.eq.s32.totalorder %s35, 0
      %p161 = por %p159, %p160
      %p162 = scmp.ne.s32.totalorder %s150, %s151
      %p163 = scmp.eq.s32.totalorder %s36, 3
      %p164 = por %p162, %p163
      %p166 = scmp.ne.s32.totalorder %s151, %s165
      %p167 = scmp.eq.s32.totalorder %s36, 0
      %p168 = por %p166, %p167
      %s170 = sadd.s32 %s169, 1
      %p173 = scmp.eq.s32.totalorder %s30, 3
      %p174 = scmp.ne.s32.totalorder %s169, %s171
      %p175 = scmp.eq.s32.totalorder %s30, 0
      %p176 = por %p174, %p175
      %p177 = scmp.ne.s32.totalorder %s169, %s171
      %p178 = scmp.eq.s32.totalorder %s35, 3
      %p179 = por %p177, %p178
      %p180 = scmp.ne.s32.totalorder %s171, %s172
      %p181 = scmp.eq.s32.totalorder %s35, 0
      %p182 = por %p180, %p181
      %p183 = scmp.ne.s32.totalorder %s171, %s172
      %p184 = scmp.eq.s32.totalorder %s36, 3
      %p185 = por %p183, %p184
      %p187 = scmp.ne.s32.totalorder %s172, %s186
      %p188 = scmp.eq.s32.totalorder %s36, 0
      %p189 = por %p187, %p188
      %s191 = sadd.s32 %s190, 1
      %p194 = scmp.eq.s32.totalorder %s30, 3
      %p195 = scmp.ne.s32.totalorder %s190, %s192
      %p196 = scmp.eq.s32.totalorder %s30, 0
      %p197 = por %p195, %p196
      %p198 = scmp.ne.s32.totalorder %s190, %s192
      %p199 = scmp.eq.s32.totalorder %s35, 3
      %p200 = por %p198, %p199
      %p201 = scmp.ne.s32.totalorder %s192, %s193
      %p202 = scmp.eq.s32.totalorder %s35, 0
      %p203 = por %p201, %p202
      %p204 = scmp.ne.s32.totalorder %s192, %s193
      %p205 = scmp.eq.s32.totalorder %s36, 3
      %p206 = por %p204, %p205
      %p208 = scmp.ne.s32.totalorder %s193, %s207
      %p209 = scmp.eq.s32.totalorder %s36, 0
      %p210 = por %p208, %p209
      %s212 = sadd.s32 %s211, 1
      %p215 = scmp.eq.s32.totalorder %s30, 3
      %p216 = scmp.ne.s32.totalorder %s211, %s213
      %p217 = scmp.eq.s32.totalorder %s30, 0
      %p218 = por %p216, %p217
      %p219 = scmp.ne.s32.totalorder %s211, %s213
      %p220 = scmp.eq.s32.totalorder %s35, 3
      %p221 = por %p219, %p220
      %p222 = scmp.ne.s32.totalorder %s213, %s214
      %p223 = scmp.eq.s32.totalorder %s35, 0
      %p224 = por %p222, %p223
      %p225 = scmp.ne.s32.totalorder %s213, %s214
      %p226 = scmp.eq.s32.totalorder %s36, 3
      %p227 = por %p225, %p226
      %p229 = scmp.ne.s32.totalorder %s214, %s228
      %p230 = scmp.eq.s32.totalorder %s36, 0
      %p231 = por %p229, %p230
      %s233 = sadd.s32 %s232, 1
      %p236 = scmp.eq.s32.totalorder %s30, 3
      %p237 = scmp.ne.s32.totalorder %s232, %s234
      %p238 = scmp.eq.s32.totalorder %s30, 0
      %p239 = por %p237, %p238
      %p240 = scmp.ne.s32.totalorder %s232, %s234
      %p241 = scmp.eq.s32.totalorder %s35, 3
      %p242 = por %p240, %p241
      %p243 = scmp.ne.s32.totalorder %s234, %s235
      %p244 = scmp.eq.s32.totalorder %s35, 0
      %p245 = por %p243, %p244
      %p246 = scmp.ne.s32.totalorder %s234, %s235
      %p247 = scmp.eq.s32.totalorder %s36, 3
      %p248 = por %p246, %p247
      %p250 = scmp.ne.s32.totalorder %s235, %s249
      %p251 = scmp.eq.s32.totalorder %s36, 0
      %p252 = por %p250, %p251
      %s254 = sadd.s32 %s253, 1
      %p257 = scmp.eq.s32.totalorder %s30, 3
      %p258 = scmp.ne.s32.totalorder %s253, %s255
      %p259 = scmp.eq.s32.totalorder %s30, 0
      %p260 = por %p258, %p259
      %p261 = scmp.ne.s32.totalorder %s253, %s255
      %p262 = scmp.eq.s32.totalorder %s35, 3
      %p263 = por %p261, %p262
      %p264 = scmp.ne.s32.totalorder %s255, %s256
      %p265 = scmp.eq.s32.totalorder %s35, 0
      %p266 = por %p264, %p265
      %p267 = scmp.ne.s32.totalorder %s255, %s256
      %p268 = scmp.eq.s32.totalorder %s36, 3
      %p269 = por %p267, %p268
      %p271 = scmp.ne.s32.totalorder %s256, %s270
      %p272 = scmp.eq.s32.totalorder %s36, 0
      %p273 = por %p271, %p272
      %s275 = sadd.s32 %s274, 1
      %p278 = scmp.eq.s32.totalorder %s30, 3
      %p279 = scmp.ne.s32.totalorder %s274, %s276
      %p280 = scmp.eq.s32.totalorder %s30, 0
      %p281 = por %p279, %p280
      %p282 = scmp.ne.s32.totalorder %s274, %s276
      %p283 = scmp.eq.s32.totalorder %s35, 3
      %p284 = por %p282, %p283
      %p285 = scmp.ne.s32.totalorder %s276, %s277
      %p286 = scmp.eq.s32.totalorder %s35, 0
      %p287 = por %p285, %p286
      %p288 = scmp.ne.s32.totalorder %s276, %s277
      %p289 = scmp.eq.s32.totalorder %s36, 3
      %p290 = por %p288, %p289
      %p292 = scmp.ne.s32.totalorder %s277, %s291
      %p293 = scmp.eq.s32.totalorder %s36, 0
      %p294 = por %p292, %p293
      %s296 = sadd.s32 %s295, 1
      %p299 = scmp.eq.s32.totalorder %s30, 3
      %p300 = scmp.ne.s32.totalorder %s295, %s297
      %p301 = scmp.eq.s32.totalorder %s30, 0
      %p302 = por %p300, %p301
      %p303 = scmp.ne.s32.totalorder %s295, %s297
      %p304 = scmp.eq.s32.totalorder %s35, 3
      %p305 = por %p303, %p304
      %p306 = scmp.ne.s32.totalorder %s297, %s298
      %p307 = scmp.eq.s32.totalorder %s35, 0
      %p308 = por %p306, %p307
      %p309 = scmp.ne.s32.totalorder %s297, %s298
      %p310 = scmp.eq.s32.totalorder %s36, 3
      %p311 = por %p309, %p310
      %p313 = scmp.ne.s32.totalorder %s298, %s312
      %p314 = scmp.eq.s32.totalorder %s36, 0
      %p315 = por %p313, %p314
      %s317 = sadd.s32 %s316, 1
      %p320 = scmp.eq.s32.totalorder %s30, 3
      %p321 = scmp.ne.s32.totalorder %s316, %s318
      %p322 = scmp.eq.s32.totalorder %s30, 0
      %p323 = por %p321, %p322
      %p324 = scmp.ne.s32.totalorder %s316, %s318
      %p325 = scmp.eq.s32.totalorder %s35, 3
      %p326 = por %p324, %p325
      %p327 = scmp.ne.s32.totalorder %s318, %s319
      %p328 = scmp.eq.s32.totalorder %s35, 0
      %p329 = por %p327, %p328
      %p330 = scmp.ne.s32.totalorder %s318, %s319
      %p331 = scmp.eq.s32.totalorder %s36, 3
      %p332 = por %p330, %p331
      %p334 = scmp.ne.s32.totalorder %s319, %s333
      %p335 = scmp.eq.s32.totalorder %s36, 0
      %p336 = por %p334, %p335
      %s338 = sadd.s32 %s337, 1
      %p341 = scmp.eq.s32.totalorder %s30, 3
      %p342 = scmp.ne.s32.totalorder %s337, %s339
      %p343 = scmp.eq.s32.totalorder %s30, 0
      %p344 = por %p342, %p343
      %p345 = scmp.ne.s32.totalorder %s337, %s339
      %p346 = scmp.eq.s32.totalorder %s35, 3
      %p347 = por %p345, %p346
      %p348 = scmp.ne.s32.totalorder %s339, %s340
      %p349 = scmp.eq.s32.totalorder %s35, 0
      %p350 = por %p348, %p349
      %p351 = scmp.ne.s32.totalorder %s339, %s340
      %p352 = scmp.eq.s32.totalorder %s36, 3
      %p353 = por %p351, %p352
      %p355 = scmp.ne.s32.totalorder %s340, %s354
      %p356 = scmp.eq.s32.totalorder %s36, 0
      %p357 = por %p355, %p356
      %s359 = sadd.s32 %s358, 1
      %p362 = scmp.eq.s32.totalorder %s30, 3
      %p363 = scmp.ne.s32.totalorder %s358, %s360
      %p364 = scmp.eq.s32.totalorder %s30, 0
      %p365 = por %p363, %p364
      %p366 = scmp.ne.s32.totalorder %s358, %s360
      %p367 = scmp.eq.s32.totalorder %s35, 3
      %p368 = por %p366, %p367
      %p369 = scmp.ne.s32.totalorder %s360, %s361
      %p370 = scmp.eq.s32.totalorder %s35, 0
      %p371 = por %p369, %p370
      %p372 = scmp.ne.s32.totalorder %s360, %s361
      %p373 = scmp.eq.s32.totalorder %s36, 3
      %p374 = por %p372, %p373
      %p376 = scmp.ne.s32.totalorder %s361, %s375
      %p377 = scmp.eq.s32.totalorder %s36, 0
      %p378 = por %p376, %p377
      %s380 = sadd.s32 %s379, 1
      %p383 = scmp.eq.s32.totalorder %s30, 3
      %p384 = scmp.ne.s32.totalorder %s379, %s381
      %p385 = scmp.eq.s32.totalorder %s30, 0
      %p386 = por %p384, %p385
      %p387 = scmp.ne.s32.totalorder %s379, %s381
      %p388 = scmp.eq.s32.totalorder %s35, 3
      %p389 = por %p387, %p388
      %p390 = scmp.ne.s32.totalorder %s381, %s382
      %p391 = scmp.eq.s32.totalorder %s35, 0
      %p392 = por %p390, %p391
      %p393 = scmp.ne.s32.totalorder %s381, %s382
      %p394 = scmp.eq.s32.totalorder %s36, 3
      %p395 = por %p393, %p394
      %p397 = scmp.ne.s32.totalorder %s382, %s396
      %p398 = scmp.eq.s32.totalorder %s36, 0
      %p399 = por %p397, %p398
      %s401 = sadd.s32 %s400, 1
      %p404 = scmp.eq.s32.totalorder %s30, 3
      %p405 = scmp.ne.s32.totalorder %s400, %s402
      %p406 = scmp.eq.s32.totalorder %s30, 0
      %p407 = por %p405, %p406
      %p408 = scmp.ne.s32.totalorder %s400, %s402
      %p409 = scmp.eq.s32.totalorder %s35, 3
      %p410 = por %p408, %p409
      %p411 = scmp.ne.s32.totalorder %s402, %s403
      %p412 = scmp.eq.s32.totalorder %s35, 0
      %p413 = por %p411, %p412
      %p414 = scmp.ne.s32.totalorder %s402, %s403
      %p415 = scmp.eq.s32.totalorder %s36, 3
      %p416 = por %p414, %p415
      %p418 = scmp.ne.s32.totalorder %s403, %s417
      %p419 = scmp.eq.s32.totalorder %s36, 0
      %p420 = por %p418, %p419
      %s422 = sadd.s32 %s421, 1
      %p425 = scmp.eq.s32.totalorder %s30, 3
      %p426 = scmp.ne.s32.totalorder %s421, %s423
      %p427 = scmp.eq.s32.totalorder %s30, 0
      %p428 = por %p426, %p427
      %p429 = scmp.ne.s32.totalorder %s421, %s423
      %p430 = scmp.eq.s32.totalorder %s35, 3
      %p431 = por %p429, %p430
      %p432 = scmp.ne.s32.totalorder %s423, %s424
      %p433 = scmp.eq.s32.totalorder %s35, 0
      %p434 = por %p432, %p433
      %p435 = scmp.ne.s32.totalorder %s423, %s424
      %p436 = scmp.eq.s32.totalorder %s36, 3
      %p437 = por %p435, %p436
      %p439 = scmp.ne.s32.totalorder %s424, %s438
      %p440 = scmp.eq.s32.totalorder %s36, 0
      %p441 = por %p439, %p440
      %s442 = ssub.s32 %s30, %s37
      %p443 = scmp.eq.s32.totalorder %s442, 0
      %s445 = sadd.s32 %s444, 1
      %s446 = scalar_select %p443, %s444, %s445
      %p449 = pneg %p443
      %p450 = scmp.eq.s32.totalorder %s30, 3
      %p451 = por %p449, %p450
      %p452 = scmp.ne.s32.totalorder %s444, %s447
      %p453 = scmp.eq.s32.totalorder %s30, 0
      %p454 = por %p452, %p453
      %p455 = scmp.ne.s32.totalorder %s444, %s447
      %p456 = scmp.eq.s32.totalorder %s35, 3
      %p457 = por %p455, %p456
      %p458 = scmp.ne.s32.totalorder %s447, %s448
      %p459 = scmp.eq.s32.totalorder %s35, 0
      %p460 = por %p458, %p459
      %p461 = scmp.ne.s32.totalorder %s447, %s448
      %p462 = scmp.eq.s32.totalorder %s36, 3
      %p463 = por %p461, %p462
      %p465 = scmp.ne.s32.totalorder %s448, %s464
      %p466 = scmp.eq.s32.totalorder %s36, 0
      %p467 = por %p465, %p466
      %p468 = scmp.le.s32.totalorder 1, %s30
      %p469 = scmp.lt.s32.totalorder %s30, 5
      %p470 = pnand %p468, %p469
      %p471 = pneg %p470
      // Predicated region
      $region9: #{tpu_custom_call.1} parent=5 // pred_check
        _
      $region10: #{tpu_custom_call.1} parent=5 // pred_check_branch
        %473 = sbr.rel (%p470) target = $region12
      $region11: #{tpu_custom_call.1} parent=5 // pred_region
        %s474 = ssub.s32 %s30, 1
        // Predicated region
        $region13: #{tpu_custom_call.1} parent=11 // pred_check
          %p475 = pneg %p77
        $region14: #{tpu_custom_call.1} parent=11 // pred_check_branch
          %477 = sbr.rel (%p475) target = $region16
        $region15: #{tpu_custom_call.1} parent=11 // pred_region
          _
        $region16: #{tpu_custom_call.1} parent=11 // pred_fallthru
          _
        // Predicated region
        $region17: #{tpu_custom_call.1} parent=11 // pred_check
          %p478 = pneg %p98
        $region18: #{tpu_custom_call.1} parent=11 // pred_check_branch
          %480 = sbr.rel (%p478) target = $region20
        $region19: #{tpu_custom_call.1} parent=11 // pred_region
          _
        $region20: #{tpu_custom_call.1} parent=11 // pred_fallthru
          _
        // Predicated region
        $region21: #{tpu_custom_call.1} parent=11 // pred_check
          %p481 = pneg %p119
        $region22: #{tpu_custom_call.1} parent=11 // pred_check_branch
          %483 = sbr.rel (%p481) target = $region24
        $region23: #{tpu_custom_call.1} parent=11 // pred_region
          _
        $region24: #{tpu_custom_call.1} parent=11 // pred_fallthru
          _
        // Predicated region
        $region25: #{tpu_custom_call.1} parent=11 // pred_check
          %p484 = pneg %p140
        $region26: #{tpu_custom_call.1} parent=11 // pred_check_branch
          %486 = sbr.rel (%p484) target = $region28
        $region27: #{tpu_custom_call.1} parent=11 // pred_region
          _
        $region28: #{tpu_custom_call.1} parent=11 // pred_fallthru
          _
        // Predicated region
        $region29: #{tpu_custom_call.1} parent=11 // pred_check
          %p487 = pneg %p161
        $region30: #{tpu_custom_call.1} parent=11 // pred_check_branch
          %489 = sbr.rel (%p487) target = $region32
        $region31: #{tpu_custom_call.1} parent=11 // pred_region
          _
        $region32: #{tpu_custom_call.1} parent=11 // pred_fallthru
          _
        // Predicated region
        $region33: #{tpu_custom_call.1} parent=11 // pred_check
          %p490 = pneg %p182
        $region34: #{tpu_custom_call.1} parent=11 // pred_check_branch
          %492 = sbr.rel (%p490) target = $region36
        $region35: #{tpu_custom_call.1} parent=11 // pred_region
          _
        $region36: #{tpu_custom_call.1} parent=11 // pred_fallthru
          _
        // Predicated region
        $region37: #{tpu_custom_call.1} parent=11 // pred_check
          %p493 = pneg %p203
        $region38: #{tpu_custom_call.1} parent=11 // pred_check_branch
          %495 = sbr.rel (%p493) target = $region40
        $region39: #{tpu_custom_call.1} parent=11 // pred_region
          _
        $region40: #{tpu_custom_call.1} parent=11 // pred_fallthru
          _
        // Predicated region
        $region41: #{tpu_custom_call.1} parent=11 // pred_check
          %p496 = pneg %p224
        $region42: #{tpu_custom_call.1} parent=11 // pred_check_branch
          %498 = sbr.rel (%p496) target = $region44
        $region43: #{tpu_custom_call.1} parent=11 // pred_region
          _
        $region44: #{tpu_custom_call.1} parent=11 // pred_fallthru
          _
        // Predicated region
        $region45: #{tpu_custom_call.1} parent=11 // pred_check
          %p499 = pneg %p245
        $region46: #{tpu_custom_call.1} parent=11 // pred_check_branch
          %501 = sbr.rel (%p499) target = $region48
        $region47: #{tpu_custom_call.1} parent=11 // pred_region
          _
        $region48: #{tpu_custom_call.1} parent=11 // pred_fallthru
          _
        // Predicated region
        $region49: #{tpu_custom_call.1} parent=11 // pred_check
          %p502 = pneg %p266
        $region50: #{tpu_custom_call.1} parent=11 // pred_check_branch
          %504 = sbr.rel (%p502) target = $region52
        $region51: #{tpu_custom_call.1} parent=11 // pred_region
          _
        $region52: #{tpu_custom_call.1} parent=11 // pred_fallthru
          _
        // Predicated region
        $region53: #{tpu_custom_call.1} parent=11 // pred_check
          %p505 = pneg %p287
        $region54: #{tpu_custom_call.1} parent=11 // pred_check_branch
          %507 = sbr.rel (%p505) target = $region56
        $region55: #{tpu_custom_call.1} parent=11 // pred_region
          _
        $region56: #{tpu_custom_call.1} parent=11 // pred_fallthru
          _
        // Predicated region
        $region57: #{tpu_custom_call.1} parent=11 // pred_check
          %p508 = pneg %p308
        $region58: #{tpu_custom_call.1} parent=11 // pred_check_branch
          %510 = sbr.rel (%p508) target = $region60
        $region59: #{tpu_custom_call.1} parent=11 // pred_region
          _
        $region60: #{tpu_custom_call.1} parent=11 // pred_fallthru
          _
        // Predicated region
        $region61: #{tpu_custom_call.1} parent=11 // pred_check
          %p511 = pneg %p329
        $region62: #{tpu_custom_call.1} parent=11 // pred_check_branch
          %513 = sbr.rel (%p511) target = $region64
        $region63: #{tpu_custom_call.1} parent=11 // pred_region
          _
        $region64: #{tpu_custom_call.1} parent=11 // pred_fallthru
          _
        // Predicated region
        $region65: #{tpu_custom_call.1} parent=11 // pred_check
          %p514 = pneg %p350
        $region66: #{tpu_custom_call.1} parent=11 // pred_check_branch
          %516 = sbr.rel (%p514) target = $region68
        $region67: #{tpu_custom_call.1} parent=11 // pred_region
          _
        $region68: #{tpu_custom_call.1} parent=11 // pred_fallthru
          _
        // Predicated region
        $region69: #{tpu_custom_call.1} parent=11 // pred_check
          %p517 = pneg %p371
        $region70: #{tpu_custom_call.1} parent=11 // pred_check_branch
          %519 = sbr.rel (%p517) target = $region72
        $region71: #{tpu_custom_call.1} parent=11 // pred_region
          _
        $region72: #{tpu_custom_call.1} parent=11 // pred_fallthru
          _
        // Predicated region
        $region73: #{tpu_custom_call.1} parent=11 // pred_check
          %p520 = pneg %p392
        $region74: #{tpu_custom_call.1} parent=11 // pred_check_branch
          %522 = sbr.rel (%p520) target = $region76
        $region75: #{tpu_custom_call.1} parent=11 // pred_region
          _
        $region76: #{tpu_custom_call.1} parent=11 // pred_fallthru
          _
        // Predicated region
        $region77: #{tpu_custom_call.1} parent=11 // pred_check
          %p523 = pneg %p413
        $region78: #{tpu_custom_call.1} parent=11 // pred_check_branch
          %525 = sbr.rel (%p523) target = $region80
        $region79: #{tpu_custom_call.1} parent=11 // pred_region
          _
        $region80: #{tpu_custom_call.1} parent=11 // pred_fallthru
          _
        // Predicated region
        $region81: #{tpu_custom_call.1} parent=11 // pred_check
          %p526 = pneg %p434
        $region82: #{tpu_custom_call.1} parent=11 // pred_check_branch
          %528 = sbr.rel (%p526) target = $region84
        $region83: #{tpu_custom_call.1} parent=11 // pred_region
          _
        $region84: #{tpu_custom_call.1} parent=11 // pred_fallthru
          _
      $region12: #{tpu_custom_call.1} parent=5 // pred_fallthru
        _
      %p529 = scmp.lt.s32.totalorder %s30, 4
      // Predicated region
      $region85: #{tpu_custom_call.1} parent=5 // pred_check
        %p530 = pneg %p529
      $region86: #{tpu_custom_call.1} parent=5 // pred_check_branch
        %532 = sbr.rel (%p530) target = $region88
      $region87: #{tpu_custom_call.1} parent=5 // pred_region
        // Predicated region
        $region89: #{tpu_custom_call.1} parent=87 // pred_check
          %p533 = pneg %p50
        $region90: #{tpu_custom_call.1} parent=87 // pred_check_branch
          %535 = sbr.rel (%p533) target = $region92
        $region91: #{tpu_custom_call.1} parent=87 // pred_region
          %s536 = smul.u32 32, %s30
          %p537 = scmp.lt.s32.totalorder %s536, 127
          %s538 = scalar_select %p537, %s536, 127
          %s539 = smul.addr %s538, 8
          %s540 = scalar_lea.vmem %s0, %s539
          %s541 = smul.u32 32, %s30
        $region92: #{tpu_custom_call.1} parent=87 // pred_fallthru
          _
      $region88: #{tpu_custom_call.1} parent=5 // pred_fallthru
        _
      %p542 = scmp.le.s32.totalorder 1, %s30
      %p543 = scmp.lt.s32.totalorder %s30, 5
      %p544 = pnand %p542, %p543
      %p545 = pneg %p544
      // Predicated region
      $region93: #{tpu_custom_call.1} parent=5 // pred_check
        _
      $region94: #{tpu_custom_call.1} parent=5 // pred_check_branch
        %547 = sbr.rel (%p544) target = $region96
      $region95: #{tpu_custom_call.1} parent=5 // pred_region
        %s548 = ssub.s32 %s30, 1
        %s549 = smul.u32 32, %s35
        %p550 = scmp.lt.s32.totalorder %s549, 127
        %s551 = scalar_select %p550, %s549, 127
        %s552 = smul.addr %s551, 8
        %s553 = scalar_lea.vmem %s0, %s552
        %p554 = pneg %p56
        %p555 = pneg %p53
        %p556 = pneg %p77
        %p557 = pneg %p74
        %p558 = pneg %p98
        %p559 = pneg %p95
        %p560 = pneg %p119
        %p561 = pneg %p116
        %p562 = pneg %p140
        %p563 = pneg %p137
        %p564 = pneg %p161
        %p565 = pneg %p158
        %p566 = pneg %p182
        %p567 = pneg %p179
        %p568 = pneg %p203
        %p569 = pneg %p200
        %p570 = pneg %p224
        %p571 = pneg %p221
        %p572 = pneg %p245
        %p573 = pneg %p242
        %p574 = pneg %p266
        %p575 = pneg %p263
        %p576 = pneg %p287
        %p577 = pneg %p284
        %p578 = pneg %p308
        %p579 = pneg %p305
        %p580 = pneg %p329
        %p581 = pneg %p326
        %p582 = pneg %p350
        %p583 = pneg %p347
        %p584 = pneg %p371
        %p585 = pneg %p368
        %p586 = pneg %p392
        %p587 = pneg %p389
        %p588 = pneg %p413
        %p589 = pneg %p410
        %p590 = pneg %p434
        %p591 = pneg %p431
        %p592 = pneg %p460
        %p593 = pneg %p457
        %s594 = sand.u32 %s447, 1
        %s595 = scalar_lea.sflag [#allocation4], %s594
        %s596 = sand.u32 %s447, 1
        %s597 = smul.addr %s596, 2
        %s598 = scalar_lea.vmem [#allocation3], %s597
        %s599 = smul.u32 32, %s35
        %p600 = scmp.lt.s32.totalorder %s599, 127
        %s601 = scalar_select %p600, %s599, 127
        %s602 = smul.addr %s601, 8
        %s603 = scalar_lea.vmem %s0, %s602
        %s604 = smul.u32 32, %s35
        %s605 = smul.u32 2, %s35
        %v607 = vld [vmem:[%s603] sm:$0xff]
        %v608 = vld [vmem:[%s603 + $0x8] sm:$0xff]
        %v609 = vld [vmem:[%s603 + $0x10] sm:$0xff]
        %v610 = vld [vmem:[%s603 + $0x18] sm:$0xff]
        %v611 = vld [vmem:[%s603 + $0x20] sm:$0xff]
        %v612 = vld [vmem:[%s603 + $0x28] sm:$0xff]
        %v613 = vld [vmem:[%s603 + $0x30] sm:$0xff]
        %v614 = vld [vmem:[%s603 + $0x38] sm:$0xff]
        %v615 = vld [vmem:[%s603 + $0x40] sm:$0xff]
        %v616 = vld [vmem:[%s603 + $0x48] sm:$0xff]
        %v617 = vld [vmem:[%s603 + $0x50] sm:$0xff]
        %v618 = vld [vmem:[%s603 + $0x58] sm:$0xff]
        %v619 = vld [vmem:[%s603 + $0x60] sm:$0xff]
        %v620 = vld [vmem:[%s603 + $0x68] sm:$0xff]
        %v621 = vld [vmem:[%s603 + $0x70] sm:$0xff]
        %v622 = vld [vmem:[%s603 + $0x78] sm:$0xff]
        %v623 = vld [vmem:[%s603 + $0x80] sm:$0xff]
        %v624 = vld [vmem:[%s603 + $0x88] sm:$0xff]
        %v625 = vld [vmem:[%s603 + $0x90] sm:$0xff]
        %v626 = vld [vmem:[%s603 + $0x98] sm:$0xff]
        %v627 = vld [vmem:[%s603 + $0xa0] sm:$0xff]
        %v628 = vld [vmem:[%s603 + $0xa8] sm:$0xff]
        %v629 = vld [vmem:[%s603 + $0xb0] sm:$0xff]
        %v630 = vld [vmem:[%s603 + $0xb8] sm:$0xff]
        %v631 = vld [vmem:[%s603 + $0xc0] sm:$0xff]
        %v632 = vld [vmem:[%s603 + $0xc8] sm:$0xff]
        %v633 = vld [vmem:[%s603 + $0xd0] sm:$0xff]
        %v634 = vld [vmem:[%s603 + $0xd8] sm:$0xff]
        %v635 = vld [vmem:[%s603 + $0xe0] sm:$0xff]
        %v636 = vld [vmem:[%s603 + $0xe8] sm:$0xff]
        %v637 = vld [vmem:[%s603 + $0xf0] sm:$0xff]
        %v638 = vld [vmem:[%s603 + $0xf8] sm:$0xff]
        %v639 = vld [vmem:[%s1] sm:$0xf]
        %v640 = vld [vmem:[%s1 + $0x4] sm:$0xf]
        %v641 = vld [vmem:[%s1 + $0x8] sm:$0xf]
        %v642 = vld [vmem:[%s1 + $0xc] sm:$0xf]
        %v643 = vld [vmem:[%s2] sm:$0x1]
        %v644 = vpack.c.bf16 %v608, %v607
        %v645 = vpack.c.bf16 %v610, %v609
        %v646 = vpack.c.bf16 %v612, %v611
        %v647 = vpack.c.bf16 %v614, %v613
        %v648 = vpack.c.bf16 %v616, %v615
        %v649 = vpack.c.bf16 %v618, %v617
        %v650 = vpack.c.bf16 %v620, %v619
        %v651 = vpack.c.bf16 %v622, %v621
        %v652 = vpack.c.bf16 %v624, %v623
        %v653 = vpack.c.bf16 %v626, %v625
        %v654 = vpack.c.bf16 %v628, %v627
        %v655 = vpack.c.bf16 %v630, %v629
        %v656 = vpack.c.bf16 %v632, %v631
        %v657 = vpack.c.bf16 %v634, %v633
        %v658 = vpack.c.bf16 %v636, %v635
        %v659 = vpack.c.bf16 %v638, %v637
        %v661 = vlaneseq
        %v662 = vshrl.u32 %v661, 7
        %v663 = vsub.s32 0, %v662
        %v664 = vrot.slane %v643, %v663
        %v670 = vunpack.c.l.b16 %v639
        %v671 = vunpack.c.l.b16 %v640
        %v672 = vunpack.c.l.b16 %v641
        %v673 = vunpack.c.l.b16 %v642
        %v674 = vpack.c.b16 %v671, %v670
        %v675 = vpack.c.b16 %v673, %v672
        %vm678 = vcmask 261120
        %v680 = vsel %vm678, %v644, 0
        %v683 = vsel %vm678, %v645, 0
        %v686 = vsel %vm678, %v646, 0
        %v689 = vsel %vm678, %v647, 0
        %v692 = vsel %vm678, %v648, 0
        %v695 = vsel %vm678, %v649, 0
        %v698 = vsel %vm678, %v650, 0
        %v701 = vsel %vm678, %v651, 0
        %v704 = vsel %vm678, %v652, 0
        %v707 = vsel %vm678, %v653, 0
        %v710 = vsel %vm678, %v654, 0
        %v713 = vsel %vm678, %v655, 0
        %v716 = vsel %vm678, %v656, 0
        %v719 = vsel %vm678, %v657, 0
        %v722 = vsel %vm678, %v658, 0
        %v725 = vsel %vm678, %v659, 0
        %727 = vmatprep.subr.bf16.mxu0 0
        %728 = vmatpush1.bf16.msra.mxu0 %v674
        %729 = vmatprep.subr.bf16.mxu0 0
        %730 = vmatpush1.bf16.msra.mxu0 %v675
        %731 = vmatprep.subr.bf16.mxu0 0
        %732 = vmatpush1.bf16.msra.mxu0 0
        %733 = vmatprep.subr.bf16.mxu0 0
        %734 = vmatpush1.bf16.msra.mxu0 0
        %735 = vmatprep.subr.bf16.mxu0 0
        %736 = vmatpush1.bf16.msra.mxu0 0
        %737 = vmatprep.subr.bf16.mxu0 0
        %738 = vmatpush1.bf16.msra.mxu0 0
        %739 = vmatprep.subr.bf16.mxu0 0
        %740 = vmatpush1.bf16.msra.mxu0 0
        %741 = vmatprep.subr.bf16.mxu0 0
        %742 = vmatpush1.bf16.msra.mxu0 0
        %743 = vmatprep.subr.bf16.mxu0 0
        %744 = vmatpush1.bf16.msra.mxu0 0
        %745 = vmatprep.subr.bf16.mxu0 0
        %746 = vmatpush1.bf16.msra.mxu0 0
        %747 = vmatprep.subr.bf16.mxu0 0
        %748 = vmatpush1.bf16.msra.mxu0 0
        %749 = vmatprep.subr.bf16.mxu0 0
        %750 = vmatpush1.bf16.msra.mxu0 0
        %751 = vmatprep.subr.bf16.mxu0 0
        %752 = vmatpush1.bf16.msra.mxu0 0
        %753 = vmatprep.subr.bf16.mxu0 0
        %754 = vmatpush1.bf16.msra.mxu0 0
        %755 = vmatprep.subr.bf16.mxu0 0
        %756 = vmatpush1.bf16.msra.mxu0 0
        %757 = vmatprep.subr.bf16.mxu0 0
        %758 = vmatpush1.bf16.msra.mxu0 0
        %759 = vmatprep.mubr.bf16.mxu0 0
        %760 = vmatmul.mubr.bf16.gmra.mrb[0].mxu0 %v680
        %v761 = vpop.f32.mrb[0].mxu0
        %v762 = vadd.f32 %v664, %v761
        %v763 = vpop.f32.mrb[0].mxu0
        %v764 = vpop.f32.mrb[0].mxu0
        %v765 = vadd.f32 %v664, %v764
        %v766 = vpop.f32.mrb[0].mxu0
        %767 = vmatprep.mubr.bf16.mxu0 0
        %768 = vmatmul.mubr.bf16.gmra.mrb[0].mxu0 %v683
        %v769 = vpop.f32.mrb[0].mxu0
        %v770 = vadd.f32 %v664, %v769
        %v771 = vpop.f32.mrb[0].mxu0
        %v772 = vpop.f32.mrb[0].mxu0
        %v773 = vadd.f32 %v664, %v772
        %v774 = vpop.f32.mrb[0].mxu0
        %775 = vmatprep.mubr.bf16.mxu0 0
        %776 = vmatmul.mubr.bf16.gmra.mrb[0].mxu0 %v686
        %v777 = vpop.f32.mrb[0].mxu0
        %v778 = vadd.f32 %v664, %v777
        %v779 = vpop.f32.mrb[0].mxu0
        %v780 = vpop.f32.mrb[0].mxu0
        %v781 = vadd.f32 %v664, %v780
        %v782 = vpop.f32.mrb[0].mxu0
        %783 = vmatprep.mubr.bf16.mxu0 0
        %784 = vmatmul.mubr.bf16.gmra.mrb[0].mxu0 %v689
        %v785 = vpop.f32.mrb[0].mxu0
        %v786 = vadd.f32 %v664, %v785
        %v787 = vpop.f32.mrb[0].mxu0
        %v788 = vpop.f32.mrb[0].mxu0
        %v789 = vadd.f32 %v664, %v788
        %v790 = vpop.f32.mrb[0].mxu0
        %791 = vmatprep.mubr.bf16.mxu0 0
        %792 = vmatmul.mubr.bf16.gmra.mrb[0].mxu0 %v692
        %v793 = vpop.f32.mrb[0].mxu0
        %v794 = vadd.f32 %v664, %v793
        %v795 = vpop.f32.mrb[0].mxu0
        %v796 = vpop.f32.mrb[0].mxu0
        %v797 = vadd.f32 %v664, %v796
        %v798 = vpop.f32.mrb[0].mxu0
        %799 = vmatprep.mubr.bf16.mxu0 0
        %800 = vmatmul.mubr.bf16.gmra.mrb[0].mxu0 %v695
        %v801 = vpop.f32.mrb[0].mxu0
        %v802 = vadd.f32 %v664, %v801
        %v803 = vpop.f32.mrb[0].mxu0
        %v804 = vpop.f32.mrb[0].mxu0
        %v805 = vadd.f32 %v664, %v804
        %v806 = vpop.f32.mrb[0].mxu0
        %807 = vmatprep.mubr.bf16.mxu0 0
        %808 = vmatmul.mubr.bf16.gmra.mrb[0].mxu0 %v698
        %v809 = vpop.f32.mrb[0].mxu0
        %v810 = vadd.f32 %v664, %v809
        %v811 = vpop.f32.mrb[0].mxu0
        %v812 = vpop.f32.mrb[0].mxu0
        %v813 = vadd.f32 %v664, %v812
        %v814 = vpop.f32.mrb[0].mxu0
        %815 = vmatprep.mubr.bf16.mxu0 0
        %816 = vmatmul.mubr.bf16.gmra.mrb[0].mxu0 %v701
        %v817 = vpop.f32.mrb[0].mxu0
        %v818 = vadd.f32 %v664, %v817
        %v819 = vpop.f32.mrb[0].mxu0
        %v820 = vpop.f32.mrb[0].mxu0
        %v821 = vadd.f32 %v664, %v820
        %v822 = vpop.f32.mrb[0].mxu0
        %823 = vmatprep.mubr.bf16.mxu0 0
        %824 = vmatmul.mubr.bf16.gmra.mrb[0].mxu0 %v704
        %v825 = vpop.f32.mrb[0].mxu0
        %v826 = vadd.f32 %v664, %v825
        %v827 = vpop.f32.mrb[0].mxu0
        %v828 = vpop.f32.mrb[0].mxu0
        %v829 = vadd.f32 %v664, %v828
        %v830 = vpop.f32.mrb[0].mxu0
        %831 = vmatprep.mubr.bf16.mxu0 0
        %832 = vmatmul.mubr.bf16.gmra.mrb[0].mxu0 %v707
        %v833 = vpop.f32.mrb[0].mxu0
        %v834 = vadd.f32 %v664, %v833
        %v835 = vpop.f32.mrb[0].mxu0
        %v836 = vpop.f32.mrb[0].mxu0
        %v837 = vadd.f32 %v664, %v836
        %v838 = vpop.f32.mrb[0].mxu0
        %839 = vmatprep.mubr.bf16.mxu0 0
        %840 = vmatmul.mubr.bf16.gmra.mrb[0].mxu0 %v710
        %v841 = vpop.f32.mrb[0].mxu0
        %v842 = vadd.f32 %v664, %v841
        %v843 = vpop.f32.mrb[0].mxu0
        %v844 = vpop.f32.mrb[0].mxu0
        %v845 = vadd.f32 %v664, %v844
        %v846 = vpop.f32.mrb[0].mxu0
        %847 = vmatprep.mubr.bf16.mxu0 0
        %848 = vmatmul.mubr.bf16.gmra.mrb[0].mxu0 %v713
        %v849 = vpop.f32.mrb[0].mxu0
        %v850 = vadd.f32 %v664, %v849
        %v851 = vpop.f32.mrb[0].mxu0
        %v852 = vpop.f32.mrb[0].mxu0
        %v853 = vadd.f32 %v664, %v852
        %v854 = vpop.f32.mrb[0].mxu0
        %855 = vmatprep.mubr.bf16.mxu0 0
        %856 = vmatmul.mubr.bf16.gmra.mrb[0].mxu0 %v716
        %v857 = vpop.f32.mrb[0].mxu0
        %v858 = vadd.f32 %v664, %v857
        %v859 = vpop.f32.mrb[0].mxu0
        %v860 = vpop.f32.mrb[0].mxu0
        %v861 = vadd.f32 %v664, %v860
        %v862 = vpop.f32.mrb[0].mxu0
        %863 = vmatprep.mubr.bf16.mxu0 0
        %864 = vmatmul.mubr.bf16.gmra.mrb[0].mxu0 %v719
        %v865 = vpop.f32.mrb[0].mxu0
        %v866 = vadd.f32 %v664, %v865
        %v867 = vpop.f32.mrb[0].mxu0
        %v868 = vpop.f32.mrb[0].mxu0
        %v869 = vadd.f32 %v664, %v868
        %v870 = vpop.f32.mrb[0].mxu0
        %871 = vmatprep.mubr.bf16.mxu0 0
        %872 = vmatmul.mubr.bf16.gmra.mrb[0].mxu0 %v722
        %v873 = vpop.f32.mrb[0].mxu0
        %v874 = vadd.f32 %v664, %v873
        %v875 = vpop.f32.mrb[0].mxu0
        %v876 = vpop.f32.mrb[0].mxu0
        %v877 = vadd.f32 %v664, %v876
        %v878 = vpop.f32.mrb[0].mxu0
        %879 = vmatprep.mubr.bf16.mxu0 0
        %880 = vmatmul.mubr.bf16.gmra.mrb[0].mxu0 %v725
        %v881 = vpop.f32.mrb[0].mxu0
        %v882 = vadd.f32 %v664, %v881
        %v883 = vpop.f32.mrb[0].mxu0
        %v884 = vpop.f32.mrb[0].mxu0
        %v885 = vadd.f32 %v664, %v884
        %v886 = vpop.f32.mrb[0].mxu0
        %887 = vdwg.mxu0
        %v888 = vmax.f32 %v762, 0.0
        %v889 = vmax.f32 %v765, 0.0
        %v890 = vmax.f32 %v770, 0.0
        %v891 = vmax.f32 %v773, 0.0
        %v892 = vmax.f32 %v778, 0.0
        %v893 = vmax.f32 %v781, 0.0
        %v894 = vmax.f32 %v786, 0.0
        %v895 = vmax.f32 %v789, 0.0
        %v896 = vmax.f32 %v794, 0.0
        %v897 = vmax.f32 %v797, 0.0
        %v898 = vmax.f32 %v802, 0.0
        %v899 = vmax.f32 %v805, 0.0
        %v900 = vmax.f32 %v810, 0.0
        %v901 = vmax.f32 %v813, 0.0
        %v902 = vmax.f32 %v818, 0.0
        %v903 = vmax.f32 %v821, 0.0
        %v904 = vmax.f32 %v826, 0.0
        %v905 = vmax.f32 %v829, 0.0
        %v906 = vmax.f32 %v834, 0.0
        %v907 = vmax.f32 %v837, 0.0
        %v908 = vmax.f32 %v842, 0.0
        %v909 = vmax.f32 %v845, 0.0
        %v910 = vmax.f32 %v850, 0.0
        %v911 = vmax.f32 %v853, 0.0
        %v912 = vmax.f32 %v858, 0.0
        %v913 = vmax.f32 %v861, 0.0
        %v914 = vmax.f32 %v866, 0.0
        %v915 = vmax.f32 %v869, 0.0
        %v916 = vmax.f32 %v874, 0.0
        %v917 = vmax.f32 %v877, 0.0
        %v918 = vmax.f32 %v882, 0.0
        %v919 = vmax.f32 %v885, 0.0
        %v920 = vld [vmem:[%s3] sm:$0xf]
        %v921 = vld [vmem:[%s3 + $0x4] sm:$0xf]
        %v922 = vld [vmem:[%s3 + $0x8] sm:$0xf]
        %v923 = vld [vmem:[%s3 + $0xc] sm:$0xf]
        %v924 = vld [vmem:[%s4] sm:$0x1]
        %v925 = vpack.c.bf16 %v889, %v888
        %v926 = vpack.c.bf16 %v891, %v890
        %v927 = vpack.c.bf16 %v893, %v892
        %v928 = vpack.c.bf16 %v895, %v894
        %v929 = vpack.c.bf16 %v897, %v896
        %v930 = vpack.c.bf16 %v899, %v898
        %v931 = vpack.c.bf16 %v901, %v900
        %v932 = vpack.c.bf16 %v903, %v902
        %v933 = vpack.c.bf16 %v905, %v904
        %v934 = vpack.c.bf16 %v907, %v906
        %v935 = vpack.c.bf16 %v909, %v908
        %v936 = vpack.c.bf16 %v911, %v910
        %v937 = vpack.c.bf16 %v913, %v912
        %v938 = vpack.c.bf16 %v915, %v914
        %v939 = vpack.c.bf16 %v917, %v916
        %v940 = vpack.c.bf16 %v919, %v918
        %v942 = vlaneseq
        %v943 = vshrl.u32 %v942, 7
        %v944 = vsub.s32 0, %v943
        %v945 = vrot.slane %v924, %v944
        %v951 = vunpack.c.l.b16 %v920
        %v952 = vunpack.c.l.b16 %v921
        %v953 = vunpack.c.l.b16 %v922
        %v954 = vunpack.c.l.b16 %v923
        %v955 = vpack.c.b16 %v952, %v951
        %v956 = vpack.c.b16 %v954, %v953
        %v960 = vsel %vm678, %v925, 0
        %v963 = vsel %vm678, %v926, 0
        %v966 = vsel %vm678, %v927, 0
        %v969 = vsel %vm678, %v928, 0
        %v972 = vsel %vm678, %v929, 0
        %v975 = vsel %vm678, %v930, 0
        %v978 = vsel %vm678, %v931, 0
        %v981 = vsel %vm678, %v932, 0
        %v984 = vsel %vm678, %v933, 0
        %v987 = vsel %vm678, %v934, 0
        %v990 = vsel %vm678, %v935, 0
        %v993 = vsel %vm678, %v936, 0
        %v996 = vsel %vm678, %v937, 0
        %v999 = vsel %vm678, %v938, 0
        %v1002 = vsel %vm678, %v939, 0
        %v1005 = vsel %vm678, %v940, 0
        %1007 = vmatprep.subr.bf16.mxu0 0
        %1008 = vmatpush1.bf16.msra.mxu0 %v955
        %1009 = vmatprep.subr.bf16.mxu0 0
        %1010 = vmatpush1.bf16.msra.mxu0 %v956
        %1011 = vmatprep.subr.bf16.mxu0 0
        %1012 = vmatpush1.bf16.msra.mxu0 0
        %1013 = vmatprep.subr.bf16.mxu0 0
        %1014 = vmatpush1.bf16.msra.mxu0 0
        %1015 = vmatprep.subr.bf16.mxu0 0
        %1016 = vmatpush1.bf16.msra.mxu0 0
        %1017 = vmatprep.subr.bf16.mxu0 0
        %1018 = vmatpush1.bf16.msra.mxu0 0
        %1019 = vmatprep.subr.bf16.mxu0 0
        %1020 = vmatpush1.bf16.msra.mxu0 0
        %1021 = vmatprep.subr.bf16.mxu0 0
        %1022 = vmatpush1.bf16.msra.mxu0 0
        %1023 = vmatprep.subr.bf16.mxu0 0
        %1024 = vmatpush1.bf16.msra.mxu0 0
        %1025 = vmatprep.subr.bf16.mxu0 0
        %1026 = vmatpush1.bf16.msra.mxu0 0
        %1027 = vmatprep.subr.bf16.mxu0 0
        %1028 = vmatpush1.bf16.msra.mxu0 0
        %1029 = vmatprep.subr.bf16.mxu0 0
        %1030 = vmatpush1.bf16.msra.mxu0 0
        %1031 = vmatprep.subr.bf16.mxu0 0
        %1032 = vmatpush1.bf16.msra.mxu0 0
        %1033 = vmatprep.subr.bf16.mxu0 0
        %1034 = vmatpush1.bf16.msra.mxu0 0
        %1035 = vmatprep.subr.bf16.mxu0 0
        %1036 = vmatpush1.bf16.msra.mxu0 0
        %1037 = vmatprep.subr.bf16.mxu0 0
        %1038 = vmatpush1.bf16.msra.mxu0 0
        %1039 = vmatprep.mubr.bf16.mxu0 0
        %1040 = vmatmul.mubr.bf16.gmra.mrb[0].mxu0 %v960
        %v1041 = vpop.f32.mrb[0].mxu0
        %v1042 = vadd.f32 %v945, %v1041
        %v1043 = vpop.f32.mrb[0].mxu0
        %v1044 = vpop.f32.mrb[0].mxu0
        %v1045 = vadd.f32 %v945, %v1044
        %v1046 = vpop.f32.mrb[0].mxu0
        %1047 = vmatprep.mubr.bf16.mxu0 0
        %1048 = vmatmul.mubr.bf16.gmra.mrb[0].mxu0 %v963
        %v1049 = vpop.f32.mrb[0].mxu0
        %v1050 = vadd.f32 %v945, %v1049
        %v1051 = vpop.f32.mrb[0].mxu0
        %v1052 = vpop.f32.mrb[0].mxu0
        %v1053 = vadd.f32 %v945, %v1052
        %v1054 = vpop.f32.mrb[0].mxu0
        %1055 = vmatprep.mubr.bf16.mxu0 0
        %1056 = vmatmul.mubr.bf16.gmra.mrb[0].mxu0 %v966
        %v1057 = vpop.f32.mrb[0].mxu0
        %v1058 = vadd.f32 %v945, %v1057
        %v1059 = vpop.f32.mrb[0].mxu0
        %v1060 = vpop.f32.mrb[0].mxu0
        %v1061 = vadd.f32 %v945, %v1060
        %v1062 = vpop.f32.mrb[0].mxu0
        %1063 = vmatprep.mubr.bf16.mxu0 0
        %1064 = vmatmul.mubr.bf16.gmra.mrb[0].mxu0 %v969
        %v1065 = vpop.f32.mrb[0].mxu0
        %v1066 = vadd.f32 %v945, %v1065
        %v1067 = vpop.f32.mrb[0].mxu0
        %v1068 = vpop.f32.mrb[0].mxu0
        %v1069 = vadd.f32 %v945, %v1068
        %v1070 = vpop.f32.mrb[0].mxu0
        %1071 = vmatprep.mubr.bf16.mxu0 0
        %1072 = vmatmul.mubr.bf16.gmra.mrb[0].mxu0 %v972
        %v1073 = vpop.f32.mrb[0].mxu0
        %v1074 = vadd.f32 %v945, %v1073
        %v1075 = vpop.f32.mrb[0].mxu0
        %v1076 = vpop.f32.mrb[0].mxu0
        %v1077 = vadd.f32 %v945, %v1076
        %v1078 = vpop.f32.mrb[0].mxu0
        %1079 = vmatprep.mubr.bf16.mxu0 0
        %1080 = vmatmul.mubr.bf16.gmra.mrb[0].mxu0 %v975
        %v1081 = vpop.f32.mrb[0].mxu0
        %v1082 = vadd.f32 %v945, %v1081
        %v1083 = vpop.f32.mrb[0].mxu0
        %v1084 = vpop.f32.mrb[0].mxu0
        %v1085 = vadd.f32 %v945, %v1084
        %v1086 = vpop.f32.mrb[0].mxu0
        %1087 = vmatprep.mubr.bf16.mxu0 0
        %1088 = vmatmul.mubr.bf16.gmra.mrb[0].mxu0 %v978
        %v1089 = vpop.f32.mrb[0].mxu0
        %v1090 = vadd.f32 %v945, %v1089
        %v1091 = vpop.f32.mrb[0].mxu0
        %v1092 = vpop.f32.mrb[0].mxu0
        %v1093 = vadd.f32 %v945, %v1092
        %v1094 = vpop.f32.mrb[0].mxu0
        %1095 = vmatprep.mubr.bf16.mxu0 0
        %1096 = vmatmul.mubr.bf16.gmra.mrb[0].mxu0 %v981
        %v1097 = vpop.f32.mrb[0].mxu0
        %v1098 = vadd.f32 %v945, %v1097
        %v1099 = vpop.f32.mrb[0].mxu0
        %v1100 = vpop.f32.mrb[0].mxu0
        %v1101 = vadd.f32 %v945, %v1100
        %v1102 = vpop.f32.mrb[0].mxu0
        %1103 = vmatprep.mubr.bf16.mxu0 0
        %1104 = vmatmul.mubr.bf16.gmra.mrb[0].mxu0 %v984
        %v1105 = vpop.f32.mrb[0].mxu0
        %v1106 = vadd.f32 %v945, %v1105
        %v1107 = vpop.f32.mrb[0].mxu0
        %v1108 = vpop.f32.mrb[0].mxu0
        %v1109 = vadd.f32 %v945, %v1108
        %v1110 = vpop.f32.mrb[0].mxu0
        %1111 = vmatprep.mubr.bf16.mxu0 0
        %1112 = vmatmul.mubr.bf16.gmra.mrb[0].mxu0 %v987
        %v1113 = vpop.f32.mrb[0].mxu0
        %v1114 = vadd.f32 %v945, %v1113
        %v1115 = vpop.f32.mrb[0].mxu0
        %v1116 = vpop.f32.mrb[0].mxu0
        %v1117 = vadd.f32 %v945, %v1116
        %v1118 = vpop.f32.mrb[0].mxu0
        %1119 = vmatprep.mubr.bf16.mxu0 0
        %1120 = vmatmul.mubr.bf16.gmra.mrb[0].mxu0 %v990
        %v1121 = vpop.f32.mrb[0].mxu0
        %v1122 = vadd.f32 %v945, %v1121
        %v1123 = vpop.f32.mrb[0].mxu0
        %v1124 = vpop.f32.mrb[0].mxu0
        %v1125 = vadd.f32 %v945, %v1124
        %v1126 = vpop.f32.mrb[0].mxu0
        %1127 = vmatprep.mubr.bf16.mxu0 0
        %1128 = vmatmul.mubr.bf16.gmra.mrb[0].mxu0 %v993
        %v1129 = vpop.f32.mrb[0].mxu0
        %v1130 = vadd.f32 %v945, %v1129
        %v1131 = vpop.f32.mrb[0].mxu0
        %v1132 = vpop.f32.mrb[0].mxu0
        %v1133 = vadd.f32 %v945, %v1132
        %v1134 = vpop.f32.mrb[0].mxu0
        %1135 = vmatprep.mubr.bf16.mxu0 0
        %1136 = vmatmul.mubr.bf16.gmra.mrb[0].mxu0 %v996
        %v1137 = vpop.f32.mrb[0].mxu0
        %v1138 = vadd.f32 %v945, %v1137
        %v1139 = vpop.f32.mrb[0].mxu0
        %v1140 = vpop.f32.mrb[0].mxu0
        %v1141 = vadd.f32 %v945, %v1140
        %v1142 = vpop.f32.mrb[0].mxu0
        %1143 = vmatprep.mubr.bf16.mxu0 0
        %1144 = vmatmul.mubr.bf16.gmra.mrb[0].mxu0 %v999
        %v1145 = vpop.f32.mrb[0].mxu0
        %v1146 = vadd.f32 %v945, %v1145
        %v1147 = vpop.f32.mrb[0].mxu0
        %v1148 = vpop.f32.mrb[0].mxu0
        %v1149 = vadd.f32 %v945, %v1148
        %v1150 = vpop.f32.mrb[0].mxu0
        %1151 = vmatprep.mubr.bf16.mxu0 0
        %1152 = vmatmul.mubr.bf16.gmra.mrb[0].mxu0 %v1002
        %v1153 = vpop.f32.mrb[0].mxu0
        %v1154 = vadd.f32 %v945, %v1153
        %v1155 = vpop.f32.mrb[0].mxu0
        %v1156 = vpop.f32.mrb[0].mxu0
        %v1157 = vadd.f32 %v945, %v1156
        %v1158 = vpop.f32.mrb[0].mxu0
        %1159 = vmatprep.mubr.bf16.mxu0 0
        %1160 = vmatmul.mubr.bf16.gmra.mrb[0].mxu0 %v1005
        %v1161 = vpop.f32.mrb[0].mxu0
        %v1162 = vadd.f32 %v945, %v1161
        %v1163 = vpop.f32.mrb[0].mxu0
        %v1164 = vpop.f32.mrb[0].mxu0
        %v1165 = vadd.f32 %v945, %v1164
        %v1166 = vpop.f32.mrb[0].mxu0
        %1167 = vdwg.mxu0
        %v1168 = vmax.f32 %v1042, 0.0
        %v1169 = vmax.f32 %v1045, 0.0
        %v1170 = vmax.f32 %v1050, 0.0
        %v1171 = vmax.f32 %v1053, 0.0
        %v1172 = vmax.f32 %v1058, 0.0
        %v1173 = vmax.f32 %v1061, 0.0
        %v1174 = vmax.f32 %v1066, 0.0
        %v1175 = vmax.f32 %v1069, 0.0
        %v1176 = vmax.f32 %v1074, 0.0
        %v1177 = vmax.f32 %v1077, 0.0
        %v1178 = vmax.f32 %v1082, 0.0
        %v1179 = vmax.f32 %v1085, 0.0
        %v1180 = vmax.f32 %v1090, 0.0
        %v1181 = vmax.f32 %v1093, 0.0
        %v1182 = vmax.f32 %v1098, 0.0
        %v1183 = vmax.f32 %v1101, 0.0
        %v1184 = vmax.f32 %v1106, 0.0
        %v1185 = vmax.f32 %v1109, 0.0
        %v1186 = vmax.f32 %v1114, 0.0
        %v1187 = vmax.f32 %v1117, 0.0
        %v1188 = vmax.f32 %v1122, 0.0
        %v1189 = vmax.f32 %v1125, 0.0
        %v1190 = vmax.f32 %v1130, 0.0
        %v1191 = vmax.f32 %v1133, 0.0
        %v1192 = vmax.f32 %v1138, 0.0
        %v1193 = vmax.f32 %v1141, 0.0
        %v1194 = vmax.f32 %v1146, 0.0
        %v1195 = vmax.f32 %v1149, 0.0
        %v1196 = vmax.f32 %v1154, 0.0
        %v1197 = vmax.f32 %v1157, 0.0
        %v1198 = vmax.f32 %v1162, 0.0
        %v1199 = vmax.f32 %v1165, 0.0
        %v1200 = vld [vmem:[%s5] sm:$0xf]
        %v1201 = vld [vmem:[%s5 + $0x4] sm:$0xf]
        %v1202 = vld [vmem:[%s5 + $0x8] sm:$0xf]
        %v1203 = vld [vmem:[%s5 + $0xc] sm:$0xf]
        %v1204 = vld [vmem:[%s6] sm:$0x1]
        %v1205 = vpack.c.bf16 %v1169, %v1168
        %v1206 = vpack.c.bf16 %v1171, %v1170
        %v1207 = vpack.c.bf16 %v1173, %v1172
        %v1208 = vpack.c.bf16 %v1175, %v1174
        %v1209 = vpack.c.bf16 %v1177, %v1176
        %v1210 = vpack.c.bf16 %v1179, %v1178
        %v1211 = vpack.c.bf16 %v1181, %v1180
        %v1212 = vpack.c.bf16 %v1183, %v1182
        %v1213 = vpack.c.bf16 %v1185, %v1184
        %v1214 = vpack.c.bf16 %v1187, %v1186
        %v1215 = vpack.c.bf16 %v1189, %v1188
        %v1216 = vpack.c.bf16 %v1191, %v1190
        %v1217 = vpack.c.bf16 %v1193, %v1192
        %v1218 = vpack.c.bf16 %v1195, %v1194
        %v1219 = vpack.c.bf16 %v1197, %v1196
        %v1220 = vpack.c.bf16 %v1199, %v1198
        %v1222 = vlaneseq
        %v1223 = vshrl.u32 %v1222, 7
        %v1224 = vsub.s32 0, %v1223
        %v1225 = vrot.slane %v1204, %v1224
        %v1231 = vunpack.c.l.b16 %v1200
        %v1232 = vunpack.c.l.b16 %v1201
        %v1233 = vunpack.c.l.b16 %v1202
        %v1234 = vunpack.c.l.b16 %v1203
        %v1235 = vpack.c.b16 %v1232, %v1231
        %v1236 = vpack.c.b16 %v1234, %v1233
        %v1240 = vsel %vm678, %v1205, 0
        %v1243 = vsel %vm678, %v1206, 0
        %v1246 = vsel %vm678, %v1207, 0
        %v1249 = vsel %vm678, %v1208, 0
        %v1252 = vsel %vm678, %v1209, 0
        %v1255 = vsel %vm678, %v1210, 0
        %v1258 = vsel %vm678, %v1211, 0
        %v1261 = vsel %vm678, %v1212, 0
        %v1264 = vsel %vm678, %v1213, 0
        %v1267 = vsel %vm678, %v1214, 0
        %v1270 = vsel %vm678, %v1215, 0
        %v1273 = vsel %vm678, %v1216, 0
        %v1276 = vsel %vm678, %v1217, 0
        %v1279 = vsel %vm678, %v1218, 0
        %v1282 = vsel %vm678, %v1219, 0
        %v1285 = vsel %vm678, %v1220, 0
        %1287 = vmatprep.subr.bf16.mxu0 0
        %1288 = vmatpush1.bf16.msra.mxu0 %v1235
        %1289 = vmatprep.subr.bf16.mxu0 0
        %1290 = vmatpush1.bf16.msra.mxu0 %v1236
        %1291 = vmatprep.subr.bf16.mxu0 0
        %1292 = vmatpush1.bf16.msra.mxu0 0
        %1293 = vmatprep.subr.bf16.mxu0 0
        %1294 = vmatpush1.bf16.msra.mxu0 0
        %1295 = vmatprep.subr.bf16.mxu0 0
        %1296 = vmatpush1.bf16.msra.mxu0 0
        %1297 = vmatprep.subr.bf16.mxu0 0
        %1298 = vmatpush1.bf16.msra.mxu0 0
        %1299 = vmatprep.subr.bf16.mxu0 0
        %1300 = vmatpush1.bf16.msra.mxu0 0
        %1301 = vmatprep.subr.bf16.mxu0 0
        %1302 = vmatpush1.bf16.msra.mxu0 0
        %1303 = vmatprep.subr.bf16.mxu0 0
        %1304 = vmatpush1.bf16.msra.mxu0 0
        %1305 = vmatprep.subr.bf16.mxu0 0
        %1306 = vmatpush1.bf16.msra.mxu0 0
        %1307 = vmatprep.subr.bf16.mxu0 0
        %1308 = vmatpush1.bf16.msra.mxu0 0
        %1309 = vmatprep.subr.bf16.mxu0 0
        %1310 = vmatpush1.bf16.msra.mxu0 0
        %1311 = vmatprep.subr.bf16.mxu0 0
        %1312 = vmatpush1.bf16.msra.mxu0 0
        %1313 = vmatprep.subr.bf16.mxu0 0
        %1314 = vmatpush1.bf16.msra.mxu0 0
        %1315 = vmatprep.subr.bf16.mxu0 0
        %1316 = vmatpush1.bf16.msra.mxu0 0
        %1317 = vmatprep.subr.bf16.mxu0 0
        %1318 = vmatpush1.bf16.msra.mxu0 0
        %1319 = vmatprep.mubr.bf16.mxu0 0
        %1320 = vmatmul.mubr.bf16.gmra.mrb[0].mxu0 %v1240
        %v1321 = vpop.f32.mrb[0].mxu0
        %v1322 = vadd.f32 %v1225, %v1321
        %v1323 = vpop.f32.mrb[0].mxu0
        %v1324 = vpop.f32.mrb[0].mxu0
        %v1325 = vadd.f32 %v1225, %v1324
        %v1326 = vpop.f32.mrb[0].mxu0
        %1327 = vmatprep.mubr.bf16.mxu0 0
        %1328 = vmatmul.mubr.bf16.gmra.mrb[0].mxu0 %v1243
        %v1329 = vpop.f32.mrb[0].mxu0
        %v1330 = vadd.f32 %v1225, %v1329
        %v1331 = vpop.f32.mrb[0].mxu0
        %v1332 = vpop.f32.mrb[0].mxu0
        %v1333 = vadd.f32 %v1225, %v1332
        %v1334 = vpop.f32.mrb[0].mxu0
        %1335 = vmatprep.mubr.bf16.mxu0 0
        %1336 = vmatmul.mubr.bf16.gmra.mrb[0].mxu0 %v1246
        %v1337 = vpop.f32.mrb[0].mxu0
        %v1338 = vadd.f32 %v1225, %v1337
        %v1339 = vpop.f32.mrb[0].mxu0
        %v1340 = vpop.f32.mrb[0].mxu0
        %v1341 = vadd.f32 %v1225, %v1340
        %v1342 = vpop.f32.mrb[0].mxu0
        %1343 = vmatprep.mubr.bf16.mxu0 0
        %1344 = vmatmul.mubr.bf16.gmra.mrb[0].mxu0 %v1249
        %v1345 = vpop.f32.mrb[0].mxu0
        %v1346 = vadd.f32 %v1225, %v1345
        %v1347 = vpop.f32.mrb[0].mxu0
        %v1348 = vpop.f32.mrb[0].mxu0
        %v1349 = vadd.f32 %v1225, %v1348
        %v1350 = vpop.f32.mrb[0].mxu0
        %1351 = vmatprep.mubr.bf16.mxu0 0
        %1352 = vmatmul.mubr.bf16.gmra.mrb[0].mxu0 %v1252
        %v1353 = vpop.f32.mrb[0].mxu0
        %v1354 = vadd.f32 %v1225, %v1353
        %v1355 = vpop.f32.mrb[0].mxu0
        %v1356 = vpop.f32.mrb[0].mxu0
        %v1357 = vadd.f32 %v1225, %v1356
        %v1358 = vpop.f32.mrb[0].mxu0
        %1359 = vmatprep.mubr.bf16.mxu0 0
        %1360 = vmatmul.mubr.bf16.gmra.mrb[0].mxu0 %v1255
        %v1361 = vpop.f32.mrb[0].mxu0
        %v1362 = vadd.f32 %v1225, %v1361
        %v1363 = vpop.f32.mrb[0].mxu0
        %v1364 = vpop.f32.mrb[0].mxu0
        %v1365 = vadd.f32 %v1225, %v1364
        %v1366 = vpop.f32.mrb[0].mxu0
        %1367 = vmatprep.mubr.bf16.mxu0 0
        %1368 = vmatmul.mubr.bf16.gmra.mrb[0].mxu0 %v1258
        %v1369 = vpop.f32.mrb[0].mxu0
        %v1370 = vadd.f32 %v1225, %v1369
        %v1371 = vpop.f32.mrb[0].mxu0
        %v1372 = vpop.f32.mrb[0].mxu0
        %v1373 = vadd.f32 %v1225, %v1372
        %v1374 = vpop.f32.mrb[0].mxu0
        %1375 = vmatprep.mubr.bf16.mxu0 0
        %1376 = vmatmul.mubr.bf16.gmra.mrb[0].mxu0 %v1261
        %v1377 = vpop.f32.mrb[0].mxu0
        %v1378 = vadd.f32 %v1225, %v1377
        %v1379 = vpop.f32.mrb[0].mxu0
        %v1380 = vpop.f32.mrb[0].mxu0
        %v1381 = vadd.f32 %v1225, %v1380
        %v1382 = vpop.f32.mrb[0].mxu0
        %1383 = vmatprep.mubr.bf16.mxu0 0
        %1384 = vmatmul.mubr.bf16.gmra.mrb[0].mxu0 %v1264
        %v1385 = vpop.f32.mrb[0].mxu0
        %v1386 = vadd.f32 %v1225, %v1385
        %v1387 = vpop.f32.mrb[0].mxu0
        %v1388 = vpop.f32.mrb[0].mxu0
        %v1389 = vadd.f32 %v1225, %v1388
        %v1390 = vpop.f32.mrb[0].mxu0
        %1391 = vmatprep.mubr.bf16.mxu0 0
        %1392 = vmatmul.mubr.bf16.gmra.mrb[0].mxu0 %v1267
        %v1393 = vpop.f32.mrb[0].mxu0
        %v1394 = vadd.f32 %v1225, %v1393
        %v1395 = vpop.f32.mrb[0].mxu0
        %v1396 = vpop.f32.mrb[0].mxu0
        %v1397 = vadd.f32 %v1225, %v1396
        %v1398 = vpop.f32.mrb[0].mxu0
        %1399 = vmatprep.mubr.bf16.mxu0 0
        %1400 = vmatmul.mubr.bf16.gmra.mrb[0].mxu0 %v1270
        %v1401 = vpop.f32.mrb[0].mxu0
        %v1402 = vadd.f32 %v1225, %v1401
        %v1403 = vpop.f32.mrb[0].mxu0
        %v1404 = vpop.f32.mrb[0].mxu0
        %v1405 = vadd.f32 %v1225, %v1404
        %v1406 = vpop.f32.mrb[0].mxu0
        %1407 = vmatprep.mubr.bf16.mxu0 0
        %1408 = vmatmul.mubr.bf16.gmra.mrb[0].mxu0 %v1273
        %v1409 = vpop.f32.mrb[0].mxu0
        %v1410 = vadd.f32 %v1225, %v1409
        %v1411 = vpop.f32.mrb[0].mxu0
        %v1412 = vpop.f32.mrb[0].mxu0
        %v1413 = vadd.f32 %v1225, %v1412
        %v1414 = vpop.f32.mrb[0].mxu0
        %1415 = vmatprep.mubr.bf16.mxu0 0
        %1416 = vmatmul.mubr.bf16.gmra.mrb[0].mxu0 %v1276
        %v1417 = vpop.f32.mrb[0].mxu0
        %v1418 = vadd.f32 %v1225, %v1417
        %v1419 = vpop.f32.mrb[0].mxu0
        %v1420 = vpop.f32.mrb[0].mxu0
        %v1421 = vadd.f32 %v1225, %v1420
        %v1422 = vpop.f32.mrb[0].mxu0
        %1423 = vmatprep.mubr.bf16.mxu0 0
        %1424 = vmatmul.mubr.bf16.gmra.mrb[0].mxu0 %v1279
        %v1425 = vpop.f32.mrb[0].mxu0
        %v1426 = vadd.f32 %v1225, %v1425
        %v1427 = vpop.f32.mrb[0].mxu0
        %v1428 = vpop.f32.mrb[0].mxu0
        %v1429 = vadd.f32 %v1225, %v1428
        %v1430 = vpop.f32.mrb[0].mxu0
        %1431 = vmatprep.mubr.bf16.mxu0 0
        %1432 = vmatmul.mubr.bf16.gmra.mrb[0].mxu0 %v1282
        %v1433 = vpop.f32.mrb[0].mxu0
        %v1434 = vadd.f32 %v1225, %v1433
        %v1435 = vpop.f32.mrb[0].mxu0
        %v1436 = vpop.f32.mrb[0].mxu0
        %v1437 = vadd.f32 %v1225, %v1436
        %v1438 = vpop.f32.mrb[0].mxu0
        %1439 = vmatprep.mubr.bf16.mxu0 0
        %1440 = vmatmul.mubr.bf16.gmra.mrb[0].mxu0 %v1285
        %v1441 = vpop.f32.mrb[0].mxu0
        %v1442 = vadd.f32 %v1225, %v1441
        %v1443 = vpop.f32.mrb[0].mxu0
        %v1444 = vpop.f32.mrb[0].mxu0
        %v1445 = vadd.f32 %v1225, %v1444
        %v1446 = vpop.f32.mrb[0].mxu0
        %1447 = vdwg.mxu0
        %v1448 = vmax.f32 %v1322, 0.0
        %v1449 = vmax.f32 %v1325, 0.0
        %v1450 = vmax.f32 %v1330, 0.0
        %v1451 = vmax.f32 %v1333, 0.0
        %v1452 = vmax.f32 %v1338, 0.0
        %v1453 = vmax.f32 %v1341, 0.0
        %v1454 = vmax.f32 %v1346, 0.0
        %v1455 = vmax.f32 %v1349, 0.0
        %v1456 = vmax.f32 %v1354, 0.0
        %v1457 = vmax.f32 %v1357, 0.0
        %v1458 = vmax.f32 %v1362, 0.0
        %v1459 = vmax.f32 %v1365, 0.0
        %v1460 = vmax.f32 %v1370, 0.0
        %v1461 = vmax.f32 %v1373, 0.0
        %v1462 = vmax.f32 %v1378, 0.0
        %v1463 = vmax.f32 %v1381, 0.0
        %v1464 = vmax.f32 %v1386, 0.0
        %v1465 = vmax.f32 %v1389, 0.0
        %v1466 = vmax.f32 %v1394, 0.0
        %v1467 = vmax.f32 %v1397, 0.0
        %v1468 = vmax.f32 %v1402, 0.0
        %v1469 = vmax.f32 %v1405, 0.0
        %v1470 = vmax.f32 %v1410, 0.0
        %v1471 = vmax.f32 %v1413, 0.0
        %v1472 = vmax.f32 %v1418, 0.0
        %v1473 = vmax.f32 %v1421, 0.0
        %v1474 = vmax.f32 %v1426, 0.0
        %v1475 = vmax.f32 %v1429, 0.0
        %v1476 = vmax.f32 %v1434, 0.0
        %v1477 = vmax.f32 %v1437, 0.0
        %v1478 = vmax.f32 %v1442, 0.0
        %v1479 = vmax.f32 %v1445, 0.0
        %v1480 = vld [vmem:[%s7] sm:$0xf]
        %v1481 = vld [vmem:[%s7 + $0x4] sm:$0xf]
        %v1482 = vld [vmem:[%s7 + $0x8] sm:$0xf]
        %v1483 = vld [vmem:[%s7 + $0xc] sm:$0xf]
        %v1484 = vld [vmem:[%s8] sm:$0x1]
        %v1485 = vpack.c.bf16 %v1449, %v1448
        %v1486 = vpack.c.bf16 %v1451, %v1450
        %v1487 = vpack.c.bf16 %v1453, %v1452
        %v1488 = vpack.c.bf16 %v1455, %v1454
        %v1489 = vpack.c.bf16 %v1457, %v1456
        %v1490 = vpack.c.bf16 %v1459, %v1458
        %v1491 = vpack.c.bf16 %v1461, %v1460
        %v1492 = vpack.c.bf16 %v1463, %v1462
        %v1493 = vpack.c.bf16 %v1465, %v1464
        %v1494 = vpack.c.bf16 %v1467, %v1466
        %v1495 = vpack.c.bf16 %v1469, %v1468
        %v1496 = vpack.c.bf16 %v1471, %v1470
        %v1497 = vpack.c.bf16 %v1473, %v1472
        %v1498 = vpack.c.bf16 %v1475, %v1474
        %v1499 = vpack.c.bf16 %v1477, %v1476
        %v1500 = vpack.c.bf16 %v1479, %v1478
        %v1502 = vlaneseq
        %v1503 = vshrl.u32 %v1502, 7
        %v1504 = vsub.s32 0, %v1503
        %v1505 = vrot.slane %v1484, %v1504
        %v1511 = vunpack.c.l.b16 %v1480
        %v1512 = vunpack.c.l.b16 %v1481
        %v1513 = vunpack.c.l.b16 %v1482
        %v1514 = vunpack.c.l.b16 %v1483
        %v1515 = vpack.c.b16 %v1512, %v1511
        %v1516 = vpack.c.b16 %v1514, %v1513
        %v1520 = vsel %vm678, %v1485, 0
        %v1523 = vsel %vm678, %v1486, 0
        %v1526 = vsel %vm678, %v1487, 0
        %v1529 = vsel %vm678, %v1488, 0
        %v1532 = vsel %vm678, %v1489, 0
        %v1535 = vsel %vm678, %v1490, 0
        %v1538 = vsel %vm678, %v1491, 0
        %v1541 = vsel %vm678, %v1492, 0
        %v1544 = vsel %vm678, %v1493, 0
        %v1547 = vsel %vm678, %v1494, 0
        %v1550 = vsel %vm678, %v1495, 0
        %v1553 = vsel %vm678, %v1496, 0
        %v1556 = vsel %vm678, %v1497, 0
        %v1559 = vsel %vm678, %v1498, 0
        %v1562 = vsel %vm678, %v1499, 0
        %v1565 = vsel %vm678, %v1500, 0
        %1567 = vmatprep.subr.bf16.mxu0 0
        %1568 = vmatpush1.bf16.msra.mxu0 %v1515
        %1569 = vmatprep.subr.bf16.mxu0 0
        %1570 = vmatpush1.bf16.msra.mxu0 %v1516
        %1571 = vmatprep.subr.bf16.mxu0 0
        %1572 = vmatpush1.bf16.msra.mxu0 0
        %1573 = vmatprep.subr.bf16.mxu0 0
        %1574 = vmatpush1.bf16.msra.mxu0 0
        %1575 = vmatprep.subr.bf16.mxu0 0
        %1576 = vmatpush1.bf16.msra.mxu0 0
        %1577 = vmatprep.subr.bf16.mxu0 0
        %1578 = vmatpush1.bf16.msra.mxu0 0
        %1579 = vmatprep.subr.bf16.mxu0 0
        %1580 = vmatpush1.bf16.msra.mxu0 0
        %1581 = vmatprep.subr.bf16.mxu0 0
        %1582 = vmatpush1.bf16.msra.mxu0 0
        %1583 = vmatprep.subr.bf16.mxu0 0
        %1584 = vmatpush1.bf16.msra.mxu0 0
        %1585 = vmatprep.subr.bf16.mxu0 0
        %1586 = vmatpush1.bf16.msra.mxu0 0
        %1587 = vmatprep.subr.bf16.mxu0 0
        %1588 = vmatpush1.bf16.msra.mxu0 0
        %1589 = vmatprep.subr.bf16.mxu0 0
        %1590 = vmatpush1.bf16.msra.mxu0 0
        %1591 = vmatprep.subr.bf16.mxu0 0
        %1592 = vmatpush1.bf16.msra.mxu0 0
        %1593 = vmatprep.subr.bf16.mxu0 0
        %1594 = vmatpush1.bf16.msra.mxu0 0
        %1595 = vmatprep.subr.bf16.mxu0 0
        %1596 = vmatpush1.bf16.msra.mxu0 0
        %1597 = vmatprep.subr.bf16.mxu0 0
        %1598 = vmatpush1.bf16.msra.mxu0 0
        %1599 = vmatprep.mubr.bf16.mxu0 0
        %1600 = vmatmul.mubr.bf16.gmra.mrb[0].mxu0 %v1520
        %v1601 = vpop.f32.mrb[0].mxu0
        %v1602 = vadd.f32 %v1505, %v1601
        %v1603 = vpop.f32.mrb[0].mxu0
        %v1604 = vpop.f32.mrb[0].mxu0
        %v1605 = vadd.f32 %v1505, %v1604
        %v1606 = vpop.f32.mrb[0].mxu0
        %1607 = vmatprep.mubr.bf16.mxu0 0
        %1608 = vmatmul.mubr.bf16.gmra.mrb[0].mxu0 %v1523
        %v1609 = vpop.f32.mrb[0].mxu0
        %v1610 = vadd.f32 %v1505, %v1609
        %v1611 = vpop.f32.mrb[0].mxu0
        %v1612 = vpop.f32.mrb[0].mxu0
        %v1613 = vadd.f32 %v1505, %v1612
        %v1614 = vpop.f32.mrb[0].mxu0
        %1615 = vmatprep.mubr.bf16.mxu0 0
        %1616 = vmatmul.mubr.bf16.gmra.mrb[0].mxu0 %v1526
        %v1617 = vpop.f32.mrb[0].mxu0
        %v1618 = vadd.f32 %v1505, %v1617
        %v1619 = vpop.f32.mrb[0].mxu0
        %v1620 = vpop.f32.mrb[0].mxu0
        %v1621 = vadd.f32 %v1505, %v1620
        %v1622 = vpop.f32.mrb[0].mxu0
        %1623 = vmatprep.mubr.bf16.mxu0 0
        %1624 = vmatmul.mubr.bf16.gmra.mrb[0].mxu0 %v1529
        %v1625 = vpop.f32.mrb[0].mxu0
        %v1626 = vadd.f32 %v1505, %v1625
        %v1627 = vpop.f32.mrb[0].mxu0
        %v1628 = vpop.f32.mrb[0].mxu0
        %v1629 = vadd.f32 %v1505, %v1628
        %v1630 = vpop.f32.mrb[0].mxu0
        %1631 = vmatprep.mubr.bf16.mxu0 0
        %1632 = vmatmul.mubr.bf16.gmra.mrb[0].mxu0 %v1532
        %v1633 = vpop.f32.mrb[0].mxu0
        %v1634 = vadd.f32 %v1505, %v1633
        %v1635 = vpop.f32.mrb[0].mxu0
        %v1636 = vpop.f32.mrb[0].mxu0
        %v1637 = vadd.f32 %v1505, %v1636
        %v1638 = vpop.f32.mrb[0].mxu0
        %1639 = vmatprep.mubr.bf16.mxu0 0
        %1640 = vmatmul.mubr.bf16.gmra.mrb[0].mxu0 %v1535
        %v1641 = vpop.f32.mrb[0].mxu0
        %v1642 = vadd.f32 %v1505, %v1641
        %v1643 = vpop.f32.mrb[0].mxu0
        %v1644 = vpop.f32.mrb[0].mxu0
        %v1645 = vadd.f32 %v1505, %v1644
        %v1646 = vpop.f32.mrb[0].mxu0
        %1647 = vmatprep.mubr.bf16.mxu0 0
        %1648 = vmatmul.mubr.bf16.gmra.mrb[0].mxu0 %v1538
        %v1649 = vpop.f32.mrb[0].mxu0
        %v1650 = vadd.f32 %v1505, %v1649
        %v1651 = vpop.f32.mrb[0].mxu0
        %v1652 = vpop.f32.mrb[0].mxu0
        %v1653 = vadd.f32 %v1505, %v1652
        %v1654 = vpop.f32.mrb[0].mxu0
        %1655 = vmatprep.mubr.bf16.mxu0 0
        %1656 = vmatmul.mubr.bf16.gmra.mrb[0].mxu0 %v1541
        %v1657 = vpop.f32.mrb[0].mxu0
        %v1658 = vadd.f32 %v1505, %v1657
        %v1659 = vpop.f32.mrb[0].mxu0
        %v1660 = vpop.f32.mrb[0].mxu0
        %v1661 = vadd.f32 %v1505, %v1660
        %v1662 = vpop.f32.mrb[0].mxu0
        %1663 = vmatprep.mubr.bf16.mxu0 0
        %1664 = vmatmul.mubr.bf16.gmra.mrb[0].mxu0 %v1544
        %v1665 = vpop.f32.mrb[0].mxu0
        %v1666 = vadd.f32 %v1505, %v1665
        %v1667 = vpop.f32.mrb[0].mxu0
        %v1668 = vpop.f32.mrb[0].mxu0
        %v1669 = vadd.f32 %v1505, %v1668
        %v1670 = vpop.f32.mrb[0].mxu0
        %1671 = vmatprep.mubr.bf16.mxu0 0
        %1672 = vmatmul.mubr.bf16.gmra.mrb[0].mxu0 %v1547
        %v1673 = vpop.f32.mrb[0].mxu0
        %v1674 = vadd.f32 %v1505, %v1673
        %v1675 = vpop.f32.mrb[0].mxu0
        %v1676 = vpop.f32.mrb[0].mxu0
        %v1677 = vadd.f32 %v1505, %v1676
        %v1678 = vpop.f32.mrb[0].mxu0
        %1679 = vmatprep.mubr.bf16.mxu0 0
        %1680 = vmatmul.mubr.bf16.gmra.mrb[0].mxu0 %v1550
        %v1681 = vpop.f32.mrb[0].mxu0
        %v1682 = vadd.f32 %v1505, %v1681
        %v1683 = vpop.f32.mrb[0].mxu0
        %v1684 = vpop.f32.mrb[0].mxu0
        %v1685 = vadd.f32 %v1505, %v1684
        %v1686 = vpop.f32.mrb[0].mxu0
        %1687 = vmatprep.mubr.bf16.mxu0 0
        %1688 = vmatmul.mubr.bf16.gmra.mrb[0].mxu0 %v1553
        %v1689 = vpop.f32.mrb[0].mxu0
        %v1690 = vadd.f32 %v1505, %v1689
        %v1691 = vpop.f32.mrb[0].mxu0
        %v1692 = vpop.f32.mrb[0].mxu0
        %v1693 = vadd.f32 %v1505, %v1692
        %v1694 = vpop.f32.mrb[0].mxu0
        %1695 = vmatprep.mubr.bf16.mxu0 0
        %1696 = vmatmul.mubr.bf16.gmra.mrb[0].mxu0 %v1556
        %v1697 = vpop.f32.mrb[0].mxu0
        %v1698 = vadd.f32 %v1505, %v1697
        %v1699 = vpop.f32.mrb[0].mxu0
        %v1700 = vpop.f32.mrb[0].mxu0
        %v1701 = vadd.f32 %v1505, %v1700
        %v1702 = vpop.f32.mrb[0].mxu0
        %1703 = vmatprep.mubr.bf16.mxu0 0
        %1704 = vmatmul.mubr.bf16.gmra.mrb[0].mxu0 %v1559
        %v1705 = vpop.f32.mrb[0].mxu0
        %v1706 = vadd.f32 %v1505, %v1705
        %v1707 = vpop.f32.mrb[0].mxu0
        %v1708 = vpop.f32.mrb[0].mxu0
        %v1709 = vadd.f32 %v1505, %v1708
        %v1710 = vpop.f32.mrb[0].mxu0
        %1711 = vmatprep.mubr.bf16.mxu0 0
        %1712 = vmatmul.mubr.bf16.gmra.mrb[0].mxu0 %v1562
        %v1713 = vpop.f32.mrb[0].mxu0
        %v1714 = vadd.f32 %v1505, %v1713
        %v1715 = vpop.f32.mrb[0].mxu0
        %v1716 = vpop.f32.mrb[0].mxu0
        %v1717 = vadd.f32 %v1505, %v1716
        %v1718 = vpop.f32.mrb[0].mxu0
        %1719 = vmatprep.mubr.bf16.mxu0 0
        %1720 = vmatmul.mubr.bf16.gmra.mrb[0].mxu0 %v1565
        %v1721 = vpop.f32.mrb[0].mxu0
        %v1722 = vadd.f32 %v1505, %v1721
        %v1723 = vpop.f32.mrb[0].mxu0
        %v1724 = vpop.f32.mrb[0].mxu0
        %v1725 = vadd.f32 %v1505, %v1724
        %v1726 = vpop.f32.mrb[0].mxu0
        %1727 = vdwg.mxu0
        %v1728 = vmax.f32 %v1602, 0.0
        %v1729 = vmax.f32 %v1605, 0.0
        %v1730 = vmax.f32 %v1610, 0.0
        %v1731 = vmax.f32 %v1613, 0.0
        %v1732 = vmax.f32 %v1618, 0.0
        %v1733 = vmax.f32 %v1621, 0.0
        %v1734 = vmax.f32 %v1626, 0.0
        %v1735 = vmax.f32 %v1629, 0.0
        %v1736 = vmax.f32 %v1634, 0.0
        %v1737 = vmax.f32 %v1637, 0.0
        %v1738 = vmax.f32 %v1642, 0.0
        %v1739 = vmax.f32 %v1645, 0.0
        %v1740 = vmax.f32 %v1650, 0.0
        %v1741 = vmax.f32 %v1653, 0.0
        %v1742 = vmax.f32 %v1658, 0.0
        %v1743 = vmax.f32 %v1661, 0.0
        %v1744 = vmax.f32 %v1666, 0.0
        %v1745 = vmax.f32 %v1669, 0.0
        %v1746 = vmax.f32 %v1674, 0.0
        %v1747 = vmax.f32 %v1677, 0.0
        %v1748 = vmax.f32 %v1682, 0.0
        %v1749 = vmax.f32 %v1685, 0.0
        %v1750 = vmax.f32 %v1690, 0.0
        %v1751 = vmax.f32 %v1693, 0.0
        %v1752 = vmax.f32 %v1698, 0.0
        %v1753 = vmax.f32 %v1701, 0.0
        %v1754 = vmax.f32 %v1706, 0.0
        %v1755 = vmax.f32 %v1709, 0.0
        %v1756 = vmax.f32 %v1714, 0.0
        %v1757 = vmax.f32 %v1717, 0.0
        %v1758 = vmax.f32 %v1722, 0.0
        %v1759 = vmax.f32 %v1725, 0.0
        %v1760 = vld [vmem:[%s9] sm:$0xf]
        %v1761 = vld [vmem:[%s9 + $0x4] sm:$0xf]
        %v1762 = vld [vmem:[%s9 + $0x8] sm:$0xf]
        %v1763 = vld [vmem:[%s9 + $0xc] sm:$0xf]
        %v1764 = vld [vmem:[%s10] sm:$0x1]
        %v1765 = vpack.c.bf16 %v1729, %v1728
        %v1766 = vpack.c.bf16 %v1731, %v1730
        %v1767 = vpack.c.bf16 %v1733, %v1732
        %v1768 = vpack.c.bf16 %v1735, %v1734
        %v1769 = vpack.c.bf16 %v1737, %v1736
        %v1770 = vpack.c.bf16 %v1739, %v1738
        %v1771 = vpack.c.bf16 %v1741, %v1740
        %v1772 = vpack.c.bf16 %v1743, %v1742
        %v1773 = vpack.c.bf16 %v1745, %v1744
        %v1774 = vpack.c.bf16 %v1747, %v1746
        %v1775 = vpack.c.bf16 %v1749, %v1748
        %v1776 = vpack.c.bf16 %v1751, %v1750
        %v1777 = vpack.c.bf16 %v1753, %v1752
        %v1778 = vpack.c.bf16 %v1755, %v1754
        %v1779 = vpack.c.bf16 %v1757, %v1756
        %v1780 = vpack.c.bf16 %v1759, %v1758
        %v1782 = vlaneseq
        %v1783 = vshrl.u32 %v1782, 7
        %v1784 = vsub.s32 0, %v1783
        %v1785 = vrot.slane %v1764, %v1784
        %v1791 = vunpack.c.l.b16 %v1760
        %v1792 = vunpack.c.l.b16 %v1761
        %v1793 = vunpack.c.l.b16 %v1762
        %v1794 = vunpack.c.l.b16 %v1763
        %v1795 = vpack.c.b16 %v1792, %v1791
        %v1796 = vpack.c.b16 %v1794, %v1793
        %v1800 = vsel %vm678, %v1765, 0
        %v1803 = vsel %vm678, %v1766, 0
        %v1806 = vsel %vm678, %v1767, 0
        %v1809 = vsel %vm678, %v1768, 0
        %v1812 = vsel %vm678, %v1769, 0
        %v1815 = vsel %vm678, %v1770, 0
        %v1818 = vsel %vm678, %v1771, 0
        %v1821 = vsel %vm678, %v1772, 0
        %v1824 = vsel %vm678, %v1773, 0
        %v1827 = vsel %vm678, %v1774, 0
        %v1830 = vsel %vm678, %v1775, 0
        %v1833 = vsel %vm678, %v1776, 0
        %v1836 = vsel %vm678, %v1777, 0
        %v1839 = vsel %vm678, %v1778, 0
        %v1842 = vsel %vm678, %v1779, 0
        %v1845 = vsel %vm678, %v1780, 0
        %1847 = vmatprep.subr.bf16.mxu0 0
        %1848 = vmatpush1.bf16.msra.mxu0 %v1795
        %1849 = vmatprep.subr.bf16.mxu0 0
        %1850 = vmatpush1.bf16.msra.mxu0 %v1796
        %1851 = vmatprep.subr.bf16.mxu0 0
        %1852 = vmatpush1.bf16.msra.mxu0 0
        %1853 = vmatprep.subr.bf16.mxu0 0
        %1854 = vmatpush1.bf16.msra.mxu0 0
        %1855 = vmatprep.subr.bf16.mxu0 0
        %1856 = vmatpush1.bf16.msra.mxu0 0
        %1857 = vmatprep.subr.bf16.mxu0 0
        %1858 = vmatpush1.bf16.msra.mxu0 0
        %1859 = vmatprep.subr.bf16.mxu0 0
        %1860 = vmatpush1.bf16.msra.mxu0 0
        %1861 = vmatprep.subr.bf16.mxu0 0
        %1862 = vmatpush1.bf16.msra.mxu0 0
        %1863 = vmatprep.subr.bf16.mxu0 0
        %1864 = vmatpush1.bf16.msra.mxu0 0
        %1865 = vmatprep.subr.bf16.mxu0 0
        %1866 = vmatpush1.bf16.msra.mxu0 0
        %1867 = vmatprep.subr.bf16.mxu0 0
        %1868 = vmatpush1.bf16.msra.mxu0 0
        %1869 = vmatprep.subr.bf16.mxu0 0
        %1870 = vmatpush1.bf16.msra.mxu0 0
        %1871 = vmatprep.subr.bf16.mxu0 0
        %1872 = vmatpush1.bf16.msra.mxu0 0
        %1873 = vmatprep.subr.bf16.mxu0 0
        %1874 = vmatpush1.bf16.msra.mxu0 0
        %1875 = vmatprep.subr.bf16.mxu0 0
        %1876 = vmatpush1.bf16.msra.mxu0 0
        %1877 = vmatprep.subr.bf16.mxu0 0
        %1878 = vmatpush1.bf16.msra.mxu0 0
        %1879 = vmatprep.mubr.bf16.mxu0 0
        %1880 = vmatmul.mubr.bf16.gmra.mrb[0].mxu0 %v1800
        %v1881 = vpop.f32.mrb[0].mxu0
        %v1882 = vadd.f32 %v1785, %v1881
        %v1883 = vpop.f32.mrb[0].mxu0
        %v1884 = vpop.f32.mrb[0].mxu0
        %v1885 = vadd.f32 %v1785, %v1884
        %v1886 = vpop.f32.mrb[0].mxu0
        %1887 = vmatprep.mubr.bf16.mxu0 0
        %1888 = vmatmul.mubr.bf16.gmra.mrb[0].mxu0 %v1803
        %v1889 = vpop.f32.mrb[0].mxu0
        %v1890 = vadd.f32 %v1785, %v1889
        %v1891 = vpop.f32.mrb[0].mxu0
        %v1892 = vpop.f32.mrb[0].mxu0
        %v1893 = vadd.f32 %v1785, %v1892
        %v1894 = vpop.f32.mrb[0].mxu0
        %1895 = vmatprep.mubr.bf16.mxu0 0
        %1896 = vmatmul.mubr.bf16.gmra.mrb[0].mxu0 %v1806
        %v1897 = vpop.f32.mrb[0].mxu0
        %v1898 = vadd.f32 %v1785, %v1897
        %v1899 = vpop.f32.mrb[0].mxu0
        %v1900 = vpop.f32.mrb[0].mxu0
        %v1901 = vadd.f32 %v1785, %v1900
        %v1902 = vpop.f32.mrb[0].mxu0
        %1903 = vmatprep.mubr.bf16.mxu0 0
        %1904 = vmatmul.mubr.bf16.gmra.mrb[0].mxu0 %v1809
        %v1905 = vpop.f32.mrb[0].mxu0
        %v1906 = vadd.f32 %v1785, %v1905
        %v1907 = vpop.f32.mrb[0].mxu0
        %v1908 = vpop.f32.mrb[0].mxu0
        %v1909 = vadd.f32 %v1785, %v1908
        %v1910 = vpop.f32.mrb[0].mxu0
        %1911 = vmatprep.mubr.bf16.mxu0 0
        %1912 = vmatmul.mubr.bf16.gmra.mrb[0].mxu0 %v1812
        %v1913 = vpop.f32.mrb[0].mxu0
        %v1914 = vadd.f32 %v1785, %v1913
        %v1915 = vpop.f32.mrb[0].mxu0
        %v1916 = vpop.f32.mrb[0].mxu0
        %v1917 = vadd.f32 %v1785, %v1916
        %v1918 = vpop.f32.mrb[0].mxu0
        %1919 = vmatprep.mubr.bf16.mxu0 0
        %1920 = vmatmul.mubr.bf16.gmra.mrb[0].mxu0 %v1815
        %v1921 = vpop.f32.mrb[0].mxu0
        %v1922 = vadd.f32 %v1785, %v1921
        %v1923 = vpop.f32.mrb[0].mxu0
        %v1924 = vpop.f32.mrb[0].mxu0
        %v1925 = vadd.f32 %v1785, %v1924
        %v1926 = vpop.f32.mrb[0].mxu0
        %1927 = vmatprep.mubr.bf16.mxu0 0
        %1928 = vmatmul.mubr.bf16.gmra.mrb[0].mxu0 %v1818
        %v1929 = vpop.f32.mrb[0].mxu0
        %v1930 = vadd.f32 %v1785, %v1929
        %v1931 = vpop.f32.mrb[0].mxu0
        %v1932 = vpop.f32.mrb[0].mxu0
        %v1933 = vadd.f32 %v1785, %v1932
        %v1934 = vpop.f32.mrb[0].mxu0
        %1935 = vmatprep.mubr.bf16.mxu0 0
        %1936 = vmatmul.mubr.bf16.gmra.mrb[0].mxu0 %v1821
        %v1937 = vpop.f32.mrb[0].mxu0
        %v1938 = vadd.f32 %v1785, %v1937
        %v1939 = vpop.f32.mrb[0].mxu0
        %v1940 = vpop.f32.mrb[0].mxu0
        %v1941 = vadd.f32 %v1785, %v1940
        %v1942 = vpop.f32.mrb[0].mxu0
        %1943 = vmatprep.mubr.bf16.mxu0 0
        %1944 = vmatmul.mubr.bf16.gmra.mrb[0].mxu0 %v1824
        %v1945 = vpop.f32.mrb[0].mxu0
        %v1946 = vadd.f32 %v1785, %v1945
        %v1947 = vpop.f32.mrb[0].mxu0
        %v1948 = vpop.f32.mrb[0].mxu0
        %v1949 = vadd.f32 %v1785, %v1948
        %v1950 = vpop.f32.mrb[0].mxu0
        %1951 = vmatprep.mubr.bf16.mxu0 0
        %1952 = vmatmul.mubr.bf16.gmra.mrb[0].mxu0 %v1827
        %v1953 = vpop.f32.mrb[0].mxu0
        %v1954 = vadd.f32 %v1785, %v1953
        %v1955 = vpop.f32.mrb[0].mxu0
        %v1956 = vpop.f32.mrb[0].mxu0
        %v1957 = vadd.f32 %v1785, %v1956
        %v1958 = vpop.f32.mrb[0].mxu0
        %1959 = vmatprep.mubr.bf16.mxu0 0
        %1960 = vmatmul.mubr.bf16.gmra.mrb[0].mxu0 %v1830
        %v1961 = vpop.f32.mrb[0].mxu0
        %v1962 = vadd.f32 %v1785, %v1961
        %v1963 = vpop.f32.mrb[0].mxu0
        %v1964 = vpop.f32.mrb[0].mxu0
        %v1965 = vadd.f32 %v1785, %v1964
        %v1966 = vpop.f32.mrb[0].mxu0
        %1967 = vmatprep.mubr.bf16.mxu0 0
        %1968 = vmatmul.mubr.bf16.gmra.mrb[0].mxu0 %v1833
        %v1969 = vpop.f32.mrb[0].mxu0
        %v1970 = vadd.f32 %v1785, %v1969
        %v1971 = vpop.f32.mrb[0].mxu0
        %v1972 = vpop.f32.mrb[0].mxu0
        %v1973 = vadd.f32 %v1785, %v1972
        %v1974 = vpop.f32.mrb[0].mxu0
        %1975 = vmatprep.mubr.bf16.mxu0 0
        %1976 = vmatmul.mubr.bf16.gmra.mrb[0].mxu0 %v1836
        %v1977 = vpop.f32.mrb[0].mxu0
        %v1978 = vadd.f32 %v1785, %v1977
        %v1979 = vpop.f32.mrb[0].mxu0
        %v1980 = vpop.f32.mrb[0].mxu0
        %v1981 = vadd.f32 %v1785, %v1980
        %v1982 = vpop.f32.mrb[0].mxu0
        %1983 = vmatprep.mubr.bf16.mxu0 0
        %1984 = vmatmul.mubr.bf16.gmra.mrb[0].mxu0 %v1839
        %v1985 = vpop.f32.mrb[0].mxu0
        %v1986 = vadd.f32 %v1785, %v1985
        %v1987 = vpop.f32.mrb[0].mxu0
        %v1988 = vpop.f32.mrb[0].mxu0
        %v1989 = vadd.f32 %v1785, %v1988
        %v1990 = vpop.f32.mrb[0].mxu0
        %1991 = vmatprep.mubr.bf16.mxu0 0
        %1992 = vmatmul.mubr.bf16.gmra.mrb[0].mxu0 %v1842
        %v1993 = vpop.f32.mrb[0].mxu0
        %v1994 = vadd.f32 %v1785, %v1993
        %v1995 = vpop.f32.mrb[0].mxu0
        %v1996 = vpop.f32.mrb[0].mxu0
        %v1997 = vadd.f32 %v1785, %v1996
        %v1998 = vpop.f32.mrb[0].mxu0
        %1999 = vmatprep.mubr.bf16.mxu0 0
        %2000 = vmatmul.mubr.bf16.gmra.mrb[0].mxu0 %v1845
        %v2001 = vpop.f32.mrb[0].mxu0
        %v2002 = vadd.f32 %v1785, %v2001
        %v2003 = vpop.f32.mrb[0].mxu0
        %v2004 = vpop.f32.mrb[0].mxu0
        %v2005 = vadd.f32 %v1785, %v2004
        %v2006 = vpop.f32.mrb[0].mxu0
        %2007 = vdwg.mxu0
        %v2008 = vmax.f32 %v1882, 0.0
        %v2009 = vmax.f32 %v1885, 0.0
        %v2010 = vmax.f32 %v1890, 0.0
        %v2011 = vmax.f32 %v1893, 0.0
        %v2012 = vmax.f32 %v1898, 0.0
        %v2013 = vmax.f32 %v1901, 0.0
        %v2014 = vmax.f32 %v1906, 0.0
        %v2015 = vmax.f32 %v1909, 0.0
        %v2016 = vmax.f32 %v1914, 0.0
        %v2017 = vmax.f32 %v1917, 0.0
        %v2018 = vmax.f32 %v1922, 0.0
        %v2019 = vmax.f32 %v1925, 0.0
        %v2020 = vmax.f32 %v1930, 0.0
        %v2021 = vmax.f32 %v1933, 0.0
        %v2022 = vmax.f32 %v1938, 0.0
        %v2023 = vmax.f32 %v1941, 0.0
        %v2024 = vmax.f32 %v1946, 0.0
        %v2025 = vmax.f32 %v1949, 0.0
        %v2026 = vmax.f32 %v1954, 0.0
        %v2027 = vmax.f32 %v1957, 0.0
        %v2028 = vmax.f32 %v1962, 0.0
        %v2029 = vmax.f32 %v1965, 0.0
        %v2030 = vmax.f32 %v1970, 0.0
        %v2031 = vmax.f32 %v1973, 0.0
        %v2032 = vmax.f32 %v1978, 0.0
        %v2033 = vmax.f32 %v1981, 0.0
        %v2034 = vmax.f32 %v1986, 0.0
        %v2035 = vmax.f32 %v1989, 0.0
        %v2036 = vmax.f32 %v1994, 0.0
        %v2037 = vmax.f32 %v1997, 0.0
        %v2038 = vmax.f32 %v2002, 0.0
        %v2039 = vmax.f32 %v2005, 0.0
        %v2040 = vld [vmem:[%s11] sm:$0xf]
        %v2041 = vld [vmem:[%s11 + $0x4] sm:$0xf]
        %v2042 = vld [vmem:[%s11 + $0x8] sm:$0xf]
        %v2043 = vld [vmem:[%s11 + $0xc] sm:$0xf]
        %v2044 = vld [vmem:[%s12] sm:$0x1]
        %v2045 = vpack.c.bf16 %v2009, %v2008
        %v2046 = vpack.c.bf16 %v2011, %v2010
        %v2047 = vpack.c.bf16 %v2013, %v2012
        %v2048 = vpack.c.bf16 %v2015, %v2014
        %v2049 = vpack.c.bf16 %v2017, %v2016
        %v2050 = vpack.c.bf16 %v2019, %v2018
        %v2051 = vpack.c.bf16 %v2021, %v2020
        %v2052 = vpack.c.bf16 %v2023, %v2022
        %v2053 = vpack.c.bf16 %v2025, %v2024
        %v2054 = vpack.c.bf16 %v2027, %v2026
        %v2055 = vpack.c.bf16 %v2029, %v2028
        %v2056 = vpack.c.bf16 %v2031, %v2030
        %v2057 = vpack.c.bf16 %v2033, %v2032
        %v2058 = vpack.c.bf16 %v2035, %v2034
        %v2059 = vpack.c.bf16 %v2037, %v2036
        %v2060 = vpack.c.bf16 %v2039, %v2038
        %v2062 = vlaneseq
        %v2063 = vshrl.u32 %v2062, 7
        %v2064 = vsub.s32 0, %v2063
        %v2065 = vrot.slane %v2044, %v2064
        %v2071 = vunpack.c.l.b16 %v2040
        %v2072 = vunpack.c.l.b16 %v2041
        %v2073 = vunpack.c.l.b16 %v2042
        %v2074 = vunpack.c.l.b16 %v2043
        %v2075 = vpack.c.b16 %v2072, %v2071
        %v2076 = vpack.c.b16 %v2074, %v2073
        %v2080 = vsel %vm678, %v2045, 0
        %v2083 = vsel %vm678, %v2046, 0
        %v2086 = vsel %vm678, %v2047, 0
        %v2089 = vsel %vm678, %v2048, 0
        %v2092 = vsel %vm678, %v2049, 0
        %v2095 = vsel %vm678, %v2050, 0
        %v2098 = vsel %vm678, %v2051, 0
        %v2101 = vsel %vm678, %v2052, 0
        %v2104 = vsel %vm678, %v2053, 0
        %v2107 = vsel %vm678, %v2054, 0
        %v2110 = vsel %vm678, %v2055, 0
        %v2113 = vsel %vm678, %v2056, 0
        %v2116 = vsel %vm678, %v2057, 0
        %v2119 = vsel %vm678, %v2058, 0
        %v2122 = vsel %vm678, %v2059, 0
        %v2125 = vsel %vm678, %v2060, 0
        %2127 = vmatprep.subr.bf16.mxu0 0
        %2128 = vmatpush1.bf16.msra.mxu0 %v2075
        %2129 = vmatprep.subr.bf16.mxu0 0
        %2130 = vmatpush1.bf16.msra.mxu0 %v2076
        %2131 = vmatprep.subr.bf16.mxu0 0
        %2132 = vmatpush1.bf16.msra.mxu0 0
        %2133 = vmatprep.subr.bf16.mxu0 0
        %2134 = vmatpush1.bf16.msra.mxu0 0
        %2135 = vmatprep.subr.bf16.mxu0 0
        %2136 = vmatpush1.bf16.msra.mxu0 0
        %2137 = vmatprep.subr.bf16.mxu0 0
        %2138 = vmatpush1.bf16.msra.mxu0 0
        %2139 = vmatprep.subr.bf16.mxu0 0
        %2140 = vmatpush1.bf16.msra.mxu0 0
        %2141 = vmatprep.subr.bf16.mxu0 0
        %2142 = vmatpush1.bf16.msra.mxu0 0
        %2143 = vmatprep.subr.bf16.mxu0 0
        %2144 = vmatpush1.bf16.msra.mxu0 0
        %2145 = vmatprep.subr.bf16.mxu0 0
        %2146 = vmatpush1.bf16.msra.mxu0 0
        %2147 = vmatprep.subr.bf16.mxu0 0
        %2148 = vmatpush1.bf16.msra.mxu0 0
        %2149 = vmatprep.subr.bf16.mxu0 0
        %2150 = vmatpush1.bf16.msra.mxu0 0
        %2151 = vmatprep.subr.bf16.mxu0 0
        %2152 = vmatpush1.bf16.msra.mxu0 0
        %2153 = vmatprep.subr.bf16.mxu0 0
        %2154 = vmatpush1.bf16.msra.mxu0 0
        %2155 = vmatprep.subr.bf16.mxu0 0
        %2156 = vmatpush1.bf16.msra.mxu0 0
        %2157 = vmatprep.subr.bf16.mxu0 0
        %2158 = vmatpush1.bf16.msra.mxu0 0
        %2159 = vmatprep.mubr.bf16.mxu0 0
        %2160 = vmatmul.mubr.bf16.gmra.mrb[0].mxu0 %v2080
        %v2161 = vpop.f32.mrb[0].mxu0
        %v2162 = vadd.f32 %v2065, %v2161
        %v2163 = vpop.f32.mrb[0].mxu0
        %v2164 = vpop.f32.mrb[0].mxu0
        %v2165 = vadd.f32 %v2065, %v2164
        %v2166 = vpop.f32.mrb[0].mxu0
        %2167 = vmatprep.mubr.bf16.mxu0 0
        %2168 = vmatmul.mubr.bf16.gmra.mrb[0].mxu0 %v2083
        %v2169 = vpop.f32.mrb[0].mxu0
        %v2170 = vadd.f32 %v2065, %v2169
        %v2171 = vpop.f32.mrb[0].mxu0
        %v2172 = vpop.f32.mrb[0].mxu0
        %v2173 = vadd.f32 %v2065, %v2172
        %v2174 = vpop.f32.mrb[0].mxu0
        %2175 = vmatprep.mubr.bf16.mxu0 0
        %2176 = vmatmul.mubr.bf16.gmra.mrb[0].mxu0 %v2086
        %v2177 = vpop.f32.mrb[0].mxu0
        %v2178 = vadd.f32 %v2065, %v2177
        %v2179 = vpop.f32.mrb[0].mxu0
        %v2180 = vpop.f32.mrb[0].mxu0
        %v2181 = vadd.f32 %v2065, %v2180
        %v2182 = vpop.f32.mrb[0].mxu0
        %2183 = vmatprep.mubr.bf16.mxu0 0
        %2184 = vmatmul.mubr.bf16.gmra.mrb[0].mxu0 %v2089
        %v2185 = vpop.f32.mrb[0].mxu0
        %v2186 = vadd.f32 %v2065, %v2185
        %v2187 = vpop.f32.mrb[0].mxu0
        %v2188 = vpop.f32.mrb[0].mxu0
        %v2189 = vadd.f32 %v2065, %v2188
        %v2190 = vpop.f32.mrb[0].mxu0
        %2191 = vmatprep.mubr.bf16.mxu0 0
        %2192 = vmatmul.mubr.bf16.gmra.mrb[0].mxu0 %v2092
        %v2193 = vpop.f32.mrb[0].mxu0
        %v2194 = vadd.f32 %v2065, %v2193
        %v2195 = vpop.f32.mrb[0].mxu0
        %v2196 = vpop.f32.mrb[0].mxu0
        %v2197 = vadd.f32 %v2065, %v2196
        %v2198 = vpop.f32.mrb[0].mxu0
        %2199 = vmatprep.mubr.bf16.mxu0 0
        %2200 = vmatmul.mubr.bf16.gmra.mrb[0].mxu0 %v2095
        %v2201 = vpop.f32.mrb[0].mxu0
        %v2202 = vadd.f32 %v2065, %v2201
        %v2203 = vpop.f32.mrb[0].mxu0
        %v2204 = vpop.f32.mrb[0].mxu0
        %v2205 = vadd.f32 %v2065, %v2204
        %v2206 = vpop.f32.mrb[0].mxu0
        %2207 = vmatprep.mubr.bf16.mxu0 0
        %2208 = vmatmul.mubr.bf16.gmra.mrb[0].mxu0 %v2098
        %v2209 = vpop.f32.mrb[0].mxu0
        %v2210 = vadd.f32 %v2065, %v2209
        %v2211 = vpop.f32.mrb[0].mxu0
        %v2212 = vpop.f32.mrb[0].mxu0
        %v2213 = vadd.f32 %v2065, %v2212
        %v2214 = vpop.f32.mrb[0].mxu0
        %2215 = vmatprep.mubr.bf16.mxu0 0
        %2216 = vmatmul.mubr.bf16.gmra.mrb[0].mxu0 %v2101
        %v2217 = vpop.f32.mrb[0].mxu0
        %v2218 = vadd.f32 %v2065, %v2217
        %v2219 = vpop.f32.mrb[0].mxu0
        %v2220 = vpop.f32.mrb[0].mxu0
        %v2221 = vadd.f32 %v2065, %v2220
        %v2222 = vpop.f32.mrb[0].mxu0
        %2223 = vmatprep.mubr.bf16.mxu0 0
        %2224 = vmatmul.mubr.bf16.gmra.mrb[0].mxu0 %v2104
        %v2225 = vpop.f32.mrb[0].mxu0
        %v2226 = vadd.f32 %v2065, %v2225
        %v2227 = vpop.f32.mrb[0].mxu0
        %v2228 = vpop.f32.mrb[0].mxu0
        %v2229 = vadd.f32 %v2065, %v2228
        %v2230 = vpop.f32.mrb[0].mxu0
        %2231 = vmatprep.mubr.bf16.mxu0 0
        %2232 = vmatmul.mubr.bf16.gmra.mrb[0].mxu0 %v2107
        %v2233 = vpop.f32.mrb[0].mxu0
        %v2234 = vadd.f32 %v2065, %v2233
        %v2235 = vpop.f32.mrb[0].mxu0
        %v2236 = vpop.f32.mrb[0].mxu0
        %v2237 = vadd.f32 %v2065, %v2236
        %v2238 = vpop.f32.mrb[0].mxu0
        %2239 = vmatprep.mubr.bf16.mxu0 0
        %2240 = vmatmul.mubr.bf16.gmra.mrb[0].mxu0 %v2110
        %v2241 = vpop.f32.mrb[0].mxu0
        %v2242 = vadd.f32 %v2065, %v2241
        %v2243 = vpop.f32.mrb[0].mxu0
        %v2244 = vpop.f32.mrb[0].mxu0
        %v2245 = vadd.f32 %v2065, %v2244
        %v2246 = vpop.f32.mrb[0].mxu0
        %2247 = vmatprep.mubr.bf16.mxu0 0
        %2248 = vmatmul.mubr.bf16.gmra.mrb[0].mxu0 %v2113
        %v2249 = vpop.f32.mrb[0].mxu0
        %v2250 = vadd.f32 %v2065, %v2249
        %v2251 = vpop.f32.mrb[0].mxu0
        %v2252 = vpop.f32.mrb[0].mxu0
        %v2253 = vadd.f32 %v2065, %v2252
        %v2254 = vpop.f32.mrb[0].mxu0
        %2255 = vmatprep.mubr.bf16.mxu0 0
        %2256 = vmatmul.mubr.bf16.gmra.mrb[0].mxu0 %v2116
        %v2257 = vpop.f32.mrb[0].mxu0
        %v2258 = vadd.f32 %v2065, %v2257
        %v2259 = vpop.f32.mrb[0].mxu0
        %v2260 = vpop.f32.mrb[0].mxu0
        %v2261 = vadd.f32 %v2065, %v2260
        %v2262 = vpop.f32.mrb[0].mxu0
        %2263 = vmatprep.mubr.bf16.mxu0 0
        %2264 = vmatmul.mubr.bf16.gmra.mrb[0].mxu0 %v2119
        %v2265 = vpop.f32.mrb[0].mxu0
        %v2266 = vadd.f32 %v2065, %v2265
        %v2267 = vpop.f32.mrb[0].mxu0
        %v2268 = vpop.f32.mrb[0].mxu0
        %v2269 = vadd.f32 %v2065, %v2268
        %v2270 = vpop.f32.mrb[0].mxu0
        %2271 = vmatprep.mubr.bf16.mxu0 0
        %2272 = vmatmul.mubr.bf16.gmra.mrb[0].mxu0 %v2122
        %v2273 = vpop.f32.mrb[0].mxu0
        %v2274 = vadd.f32 %v2065, %v2273
        %v2275 = vpop.f32.mrb[0].mxu0
        %v2276 = vpop.f32.mrb[0].mxu0
        %v2277 = vadd.f32 %v2065, %v2276
        %v2278 = vpop.f32.mrb[0].mxu0
        %2279 = vmatprep.mubr.bf16.mxu0 0
        %2280 = vmatmul.mubr.bf16.gmra.mrb[0].mxu0 %v2125
        %v2281 = vpop.f32.mrb[0].mxu0
        %v2282 = vadd.f32 %v2065, %v2281
        %v2283 = vpop.f32.mrb[0].mxu0
        %v2284 = vpop.f32.mrb[0].mxu0
        %v2285 = vadd.f32 %v2065, %v2284
        %v2286 = vpop.f32.mrb[0].mxu0
        %2287 = vdwg.mxu0
        %v2288 = vmax.f32 %v2162, 0.0
        %v2289 = vmax.f32 %v2165, 0.0
        %v2290 = vmax.f32 %v2170, 0.0
        %v2291 = vmax.f32 %v2173, 0.0
        %v2292 = vmax.f32 %v2178, 0.0
        %v2293 = vmax.f32 %v2181, 0.0
        %v2294 = vmax.f32 %v2186, 0.0
        %v2295 = vmax.f32 %v2189, 0.0
        %v2296 = vmax.f32 %v2194, 0.0
        %v2297 = vmax.f32 %v2197, 0.0
        %v2298 = vmax.f32 %v2202, 0.0
        %v2299 = vmax.f32 %v2205, 0.0
        %v2300 = vmax.f32 %v2210, 0.0
        %v2301 = vmax.f32 %v2213, 0.0
        %v2302 = vmax.f32 %v2218, 0.0
        %v2303 = vmax.f32 %v2221, 0.0
        %v2304 = vmax.f32 %v2226, 0.0
        %v2305 = vmax.f32 %v2229, 0.0
        %v2306 = vmax.f32 %v2234, 0.0
        %v2307 = vmax.f32 %v2237, 0.0
        %v2308 = vmax.f32 %v2242, 0.0
        %v2309 = vmax.f32 %v2245, 0.0
        %v2310 = vmax.f32 %v2250, 0.0
        %v2311 = vmax.f32 %v2253, 0.0
        %v2312 = vmax.f32 %v2258, 0.0
        %v2313 = vmax.f32 %v2261, 0.0
        %v2314 = vmax.f32 %v2266, 0.0
        %v2315 = vmax.f32 %v2269, 0.0
        %v2316 = vmax.f32 %v2274, 0.0
        %v2317 = vmax.f32 %v2277, 0.0
        %v2318 = vmax.f32 %v2282, 0.0
        %v2319 = vmax.f32 %v2285, 0.0
        %v2320 = vld [vmem:[%s13] sm:$0xf]
        %v2321 = vld [vmem:[%s13 + $0x4] sm:$0xf]
        %v2322 = vld [vmem:[%s13 + $0x8] sm:$0xf]
        %v2323 = vld [vmem:[%s13 + $0xc] sm:$0xf]
        %v2324 = vld [vmem:[%s14] sm:$0x1]
        %v2325 = vpack.c.bf16 %v2289, %v2288
        %v2326 = vpack.c.bf16 %v2291, %v2290
        %v2327 = vpack.c.bf16 %v2293, %v2292
        %v2328 = vpack.c.bf16 %v2295, %v2294
        %v2329 = vpack.c.bf16 %v2297, %v2296
        %v2330 = vpack.c.bf16 %v2299, %v2298
        %v2331 = vpack.c.bf16 %v2301, %v2300
        %v2332 = vpack.c.bf16 %v2303, %v2302
        %v2333 = vpack.c.bf16 %v2305, %v2304
        %v2334 = vpack.c.bf16 %v2307, %v2306
        %v2335 = vpack.c.bf16 %v2309, %v2308
        %v2336 = vpack.c.bf16 %v2311, %v2310
        %v2337 = vpack.c.bf16 %v2313, %v2312
        %v2338 = vpack.c.bf16 %v2315, %v2314
        %v2339 = vpack.c.bf16 %v2317, %v2316
        %v2340 = vpack.c.bf16 %v2319, %v2318
        %v2342 = vlaneseq
        %v2343 = vshrl.u32 %v2342, 7
        %v2344 = vsub.s32 0, %v2343
        %v2345 = vrot.slane %v2324, %v2344
        %v2351 = vunpack.c.l.b16 %v2320
        %v2352 = vunpack.c.l.b16 %v2321
        %v2353 = vunpack.c.l.b16 %v2322
        %v2354 = vunpack.c.l.b16 %v2323
        %v2355 = vpack.c.b16 %v2352, %v2351
        %v2356 = vpack.c.b16 %v2354, %v2353
        %v2360 = vsel %vm678, %v2325, 0
        %v2363 = vsel %vm678, %v2326, 0
        %v2366 = vsel %vm678, %v2327, 0
        %v2369 = vsel %vm678, %v2328, 0
        %v2372 = vsel %vm678, %v2329, 0
        %v2375 = vsel %vm678, %v2330, 0
        %v2378 = vsel %vm678, %v2331, 0
        %v2381 = vsel %vm678, %v2332, 0
        %v2384 = vsel %vm678, %v2333, 0
        %v2387 = vsel %vm678, %v2334, 0
        %v2390 = vsel %vm678, %v2335, 0
        %v2393 = vsel %vm678, %v2336, 0
        %v2396 = vsel %vm678, %v2337, 0
        %v2399 = vsel %vm678, %v2338, 0
        %v2402 = vsel %vm678, %v2339, 0
        %v2405 = vsel %vm678, %v2340, 0
        %2407 = vmatprep.subr.bf16.mxu0 0
        %2408 = vmatpush1.bf16.msra.mxu0 %v2355
        %2409 = vmatprep.subr.bf16.mxu0 0
        %2410 = vmatpush1.bf16.msra.mxu0 %v2356
        %2411 = vmatprep.subr.bf16.mxu0 0
        %2412 = vmatpush1.bf16.msra.mxu0 0
        %2413 = vmatprep.subr.bf16.mxu0 0
        %2414 = vmatpush1.bf16.msra.mxu0 0
        %2415 = vmatprep.subr.bf16.mxu0 0
        %2416 = vmatpush1.bf16.msra.mxu0 0
        %2417 = vmatprep.subr.bf16.mxu0 0
        %2418 = vmatpush1.bf16.msra.mxu0 0
        %2419 = vmatprep.subr.bf16.mxu0 0
        %2420 = vmatpush1.bf16.msra.mxu0 0
        %2421 = vmatprep.subr.bf16.mxu0 0
        %2422 = vmatpush1.bf16.msra.mxu0 0
        %2423 = vmatprep.subr.bf16.mxu0 0
        %2424 = vmatpush1.bf16.msra.mxu0 0
        %2425 = vmatprep.subr.bf16.mxu0 0
        %2426 = vmatpush1.bf16.msra.mxu0 0
        %2427 = vmatprep.subr.bf16.mxu0 0
        %2428 = vmatpush1.bf16.msra.mxu0 0
        %2429 = vmatprep.subr.bf16.mxu0 0
        %2430 = vmatpush1.bf16.msra.mxu0 0
        %2431 = vmatprep.subr.bf16.mxu0 0
        %2432 = vmatpush1.bf16.msra.mxu0 0
        %2433 = vmatprep.subr.bf16.mxu0 0
        %2434 = vmatpush1.bf16.msra.mxu0 0
        %2435 = vmatprep.subr.bf16.mxu0 0
        %2436 = vmatpush1.bf16.msra.mxu0 0
        %2437 = vmatprep.subr.bf16.mxu0 0
        %2438 = vmatpush1.bf16.msra.mxu0 0
        %2439 = vmatprep.mubr.bf16.mxu0 0
        %2440 = vmatmul.mubr.bf16.gmra.mrb[0].mxu0 %v2360
        %v2441 = vpop.f32.mrb[0].mxu0
        %v2442 = vadd.f32 %v2345, %v2441
        %v2443 = vpop.f32.mrb[0].mxu0
        %v2444 = vpop.f32.mrb[0].mxu0
        %v2445 = vadd.f32 %v2345, %v2444
        %v2446 = vpop.f32.mrb[0].mxu0
        %2447 = vmatprep.mubr.bf16.mxu0 0
        %2448 = vmatmul.mubr.bf16.gmra.mrb[0].mxu0 %v2363
        %v2449 = vpop.f32.mrb[0].mxu0
        %v2450 = vadd.f32 %v2345, %v2449
        %v2451 = vpop.f32.mrb[0].mxu0
        %v2452 = vpop.f32.mrb[0].mxu0
        %v2453 = vadd.f32 %v2345, %v2452
        %v2454 = vpop.f32.mrb[0].mxu0
        %2455 = vmatprep.mubr.bf16.mxu0 0
        %2456 = vmatmul.mubr.bf16.gmra.mrb[0].mxu0 %v2366
        %v2457 = vpop.f32.mrb[0].mxu0
        %v2458 = vadd.f32 %v2345, %v2457
        %v2459 = vpop.f32.mrb[0].mxu0
        %v2460 = vpop.f32.mrb[0].mxu0
        %v2461 = vadd.f32 %v2345, %v2460
        %v2462 = vpop.f32.mrb[0].mxu0
        %2463 = vmatprep.mubr.bf16.mxu0 0
        %2464 = vmatmul.mubr.bf16.gmra.mrb[0].mxu0 %v2369
        %v2465 = vpop.f32.mrb[0].mxu0
        %v2466 = vadd.f32 %v2345, %v2465
        %v2467 = vpop.f32.mrb[0].mxu0
        %v2468 = vpop.f32.mrb[0].mxu0
        %v2469 = vadd.f32 %v2345, %v2468
        %v2470 = vpop.f32.mrb[0].mxu0
        %2471 = vmatprep.mubr.bf16.mxu0 0
        %2472 = vmatmul.mubr.bf16.gmra.mrb[0].mxu0 %v2372
        %v2473 = vpop.f32.mrb[0].mxu0
        %v2474 = vadd.f32 %v2345, %v2473
        %v2475 = vpop.f32.mrb[0].mxu0
        %v2476 = vpop.f32.mrb[0].mxu0
        %v2477 = vadd.f32 %v2345, %v2476
        %v2478 = vpop.f32.mrb[0].mxu0
        %2479 = vmatprep.mubr.bf16.mxu0 0
        %2480 = vmatmul.mubr.bf16.gmra.mrb[0].mxu0 %v2375
        %v2481 = vpop.f32.mrb[0].mxu0
        %v2482 = vadd.f32 %v2345, %v2481
        %v2483 = vpop.f32.mrb[0].mxu0
        %v2484 = vpop.f32.mrb[0].mxu0
        %v2485 = vadd.f32 %v2345, %v2484
        %v2486 = vpop.f32.mrb[0].mxu0
        %2487 = vmatprep.mubr.bf16.mxu0 0
        %2488 = vmatmul.mubr.bf16.gmra.mrb[0].mxu0 %v2378
        %v2489 = vpop.f32.mrb[0].mxu0
        %v2490 = vadd.f32 %v2345, %v2489
        %v2491 = vpop.f32.mrb[0].mxu0
        %v2492 = vpop.f32.mrb[0].mxu0
        %v2493 = vadd.f32 %v2345, %v2492
        %v2494 = vpop.f32.mrb[0].mxu0
        %2495 = vmatprep.mubr.bf16.mxu0 0
        %2496 = vmatmul.mubr.bf16.gmra.mrb[0].mxu0 %v2381
        %v2497 = vpop.f32.mrb[0].mxu0
        %v2498 = vadd.f32 %v2345, %v2497
        %v2499 = vpop.f32.mrb[0].mxu0
        %v2500 = vpop.f32.mrb[0].mxu0
        %v2501 = vadd.f32 %v2345, %v2500
        %v2502 = vpop.f32.mrb[0].mxu0
        %2503 = vmatprep.mubr.bf16.mxu0 0
        %2504 = vmatmul.mubr.bf16.gmra.mrb[0].mxu0 %v2384
        %v2505 = vpop.f32.mrb[0].mxu0
        %v2506 = vadd.f32 %v2345, %v2505
        %v2507 = vpop.f32.mrb[0].mxu0
        %v2508 = vpop.f32.mrb[0].mxu0
        %v2509 = vadd.f32 %v2345, %v2508
        %v2510 = vpop.f32.mrb[0].mxu0
        %2511 = vmatprep.mubr.bf16.mxu0 0
        %2512 = vmatmul.mubr.bf16.gmra.mrb[0].mxu0 %v2387
        %v2513 = vpop.f32.mrb[0].mxu0
        %v2514 = vadd.f32 %v2345, %v2513
        %v2515 = vpop.f32.mrb[0].mxu0
        %v2516 = vpop.f32.mrb[0].mxu0
        %v2517 = vadd.f32 %v2345, %v2516
        %v2518 = vpop.f32.mrb[0].mxu0
        %2519 = vmatprep.mubr.bf16.mxu0 0
        %2520 = vmatmul.mubr.bf16.gmra.mrb[0].mxu0 %v2390
        %v2521 = vpop.f32.mrb[0].mxu0
        %v2522 = vadd.f32 %v2345, %v2521
        %v2523 = vpop.f32.mrb[0].mxu0
        %v2524 = vpop.f32.mrb[0].mxu0
        %v2525 = vadd.f32 %v2345, %v2524
        %v2526 = vpop.f32.mrb[0].mxu0
        %2527 = vmatprep.mubr.bf16.mxu0 0
        %2528 = vmatmul.mubr.bf16.gmra.mrb[0].mxu0 %v2393
        %v2529 = vpop.f32.mrb[0].mxu0
        %v2530 = vadd.f32 %v2345, %v2529
        %v2531 = vpop.f32.mrb[0].mxu0
        %v2532 = vpop.f32.mrb[0].mxu0
        %v2533 = vadd.f32 %v2345, %v2532
        %v2534 = vpop.f32.mrb[0].mxu0
        %2535 = vmatprep.mubr.bf16.mxu0 0
        %2536 = vmatmul.mubr.bf16.gmra.mrb[0].mxu0 %v2396
        %v2537 = vpop.f32.mrb[0].mxu0
        %v2538 = vadd.f32 %v2345, %v2537
        %v2539 = vpop.f32.mrb[0].mxu0
        %v2540 = vpop.f32.mrb[0].mxu0
        %v2541 = vadd.f32 %v2345, %v2540
        %v2542 = vpop.f32.mrb[0].mxu0
        %2543 = vmatprep.mubr.bf16.mxu0 0
        %2544 = vmatmul.mubr.bf16.gmra.mrb[0].mxu0 %v2399
        %v2545 = vpop.f32.mrb[0].mxu0
        %v2546 = vadd.f32 %v2345, %v2545
        %v2547 = vpop.f32.mrb[0].mxu0
        %v2548 = vpop.f32.mrb[0].mxu0
        %v2549 = vadd.f32 %v2345, %v2548
        %v2550 = vpop.f32.mrb[0].mxu0
        %2551 = vmatprep.mubr.bf16.mxu0 0
        %2552 = vmatmul.mubr.bf16.gmra.mrb[0].mxu0 %v2402
        %v2553 = vpop.f32.mrb[0].mxu0
        %v2554 = vadd.f32 %v2345, %v2553
        %v2555 = vpop.f32.mrb[0].mxu0
        %v2556 = vpop.f32.mrb[0].mxu0
        %v2557 = vadd.f32 %v2345, %v2556
        %v2558 = vpop.f32.mrb[0].mxu0
        %2559 = vmatprep.mubr.bf16.mxu0 0
        %2560 = vmatmul.mubr.bf16.gmra.mrb[0].mxu0 %v2405
        %v2561 = vpop.f32.mrb[0].mxu0
        %v2562 = vadd.f32 %v2345, %v2561
        %v2563 = vpop.f32.mrb[0].mxu0
        %v2564 = vpop.f32.mrb[0].mxu0
        %v2565 = vadd.f32 %v2345, %v2564
        %v2566 = vpop.f32.mrb[0].mxu0
        %2567 = vdwg.mxu0
        %v2568 = vmax.f32 %v2442, 0.0
        %v2569 = vmax.f32 %v2445, 0.0
        %v2570 = vmax.f32 %v2450, 0.0
        %v2571 = vmax.f32 %v2453, 0.0
        %v2572 = vmax.f32 %v2458, 0.0
        %v2573 = vmax.f32 %v2461, 0.0
        %v2574 = vmax.f32 %v2466, 0.0
        %v2575 = vmax.f32 %v2469, 0.0
        %v2576 = vmax.f32 %v2474, 0.0
        %v2577 = vmax.f32 %v2477, 0.0
        %v2578 = vmax.f32 %v2482, 0.0
        %v2579 = vmax.f32 %v2485, 0.0
        %v2580 = vmax.f32 %v2490, 0.0
        %v2581 = vmax.f32 %v2493, 0.0
        %v2582 = vmax.f32 %v2498, 0.0
        %v2583 = vmax.f32 %v2501, 0.0
        %v2584 = vmax.f32 %v2506, 0.0
        %v2585 = vmax.f32 %v2509, 0.0
        %v2586 = vmax.f32 %v2514, 0.0
        %v2587 = vmax.f32 %v2517, 0.0
        %v2588 = vmax.f32 %v2522, 0.0
        %v2589 = vmax.f32 %v2525, 0.0
        %v2590 = vmax.f32 %v2530, 0.0
        %v2591 = vmax.f32 %v2533, 0.0
        %v2592 = vmax.f32 %v2538, 0.0
        %v2593 = vmax.f32 %v2541, 0.0
        %v2594 = vmax.f32 %v2546, 0.0
        %v2595 = vmax.f32 %v2549, 0.0
        %v2596 = vmax.f32 %v2554, 0.0
        %v2597 = vmax.f32 %v2557, 0.0
        %v2598 = vmax.f32 %v2562, 0.0
        %v2599 = vmax.f32 %v2565, 0.0
        %v2600 = vld [vmem:[%s15] sm:$0xf]
        %v2601 = vld [vmem:[%s15 + $0x4] sm:$0xf]
        %v2602 = vld [vmem:[%s15 + $0x8] sm:$0xf]
        %v2603 = vld [vmem:[%s15 + $0xc] sm:$0xf]
        %v2604 = vld [vmem:[%s16] sm:$0x1]
        %v2605 = vpack.c.bf16 %v2569, %v2568
        %v2606 = vpack.c.bf16 %v2571, %v2570
        %v2607 = vpack.c.bf16 %v2573, %v2572
        %v2608 = vpack.c.bf16 %v2575, %v2574
        %v2609 = vpack.c.bf16 %v2577, %v2576
        %v2610 = vpack.c.bf16 %v2579, %v2578
        %v2611 = vpack.c.bf16 %v2581, %v2580
        %v2612 = vpack.c.bf16 %v2583, %v2582
        %v2613 = vpack.c.bf16 %v2585, %v2584
        %v2614 = vpack.c.bf16 %v2587, %v2586
        %v2615 = vpack.c.bf16 %v2589, %v2588
        %v2616 = vpack.c.bf16 %v2591, %v2590
        %v2617 = vpack.c.bf16 %v2593, %v2592
        %v2618 = vpack.c.bf16 %v2595, %v2594
        %v2619 = vpack.c.bf16 %v2597, %v2596
        %v2620 = vpack.c.bf16 %v2599, %v2598
        %v2622 = vlaneseq
        %v2623 = vshrl.u32 %v2622, 7
        %v2624 = vsub.s32 0, %v2623
        %v2625 = vrot.slane %v2604, %v2624
        %v2631 = vunpack.c.l.b16 %v2600
        %v2632 = vunpack.c.l.b16 %v2601
        %v2633 = vunpack.c.l.b16 %v2602
        %v2634 = vunpack.c.l.b16 %v2603
        %v2635 = vpack.c.b16 %v2632, %v2631
        %v2636 = vpack.c.b16 %v2634, %v2633
        %v2640 = vsel %vm678, %v2605, 0
        %v2643 = vsel %vm678, %v2606, 0
        %v2646 = vsel %vm678, %v2607, 0
        %v2649 = vsel %vm678, %v2608, 0
        %v2652 = vsel %vm678, %v2609, 0
        %v2655 = vsel %vm678, %v2610, 0
        %v2658 = vsel %vm678, %v2611, 0
        %v2661 = vsel %vm678, %v2612, 0
        %v2664 = vsel %vm678, %v2613, 0
        %v2667 = vsel %vm678, %v2614, 0
        %v2670 = vsel %vm678, %v2615, 0
        %v2673 = vsel %vm678, %v2616, 0
        %v2676 = vsel %vm678, %v2617, 0
        %v2679 = vsel %vm678, %v2618, 0
        %v2682 = vsel %vm678, %v2619, 0
        %v2685 = vsel %vm678, %v2620, 0
        %2687 = vmatprep.subr.bf16.mxu0 0
        %2688 = vmatpush1.bf16.msra.mxu0 %v2635
        %2689 = vmatprep.subr.bf16.mxu0 0
        %2690 = vmatpush1.bf16.msra.mxu0 %v2636
        %2691 = vmatprep.subr.bf16.mxu0 0
        %2692 = vmatpush1.bf16.msra.mxu0 0
        %2693 = vmatprep.subr.bf16.mxu0 0
        %2694 = vmatpush1.bf16.msra.mxu0 0
        %2695 = vmatprep.subr.bf16.mxu0 0
        %2696 = vmatpush1.bf16.msra.mxu0 0
        %2697 = vmatprep.subr.bf16.mxu0 0
        %2698 = vmatpush1.bf16.msra.mxu0 0
        %2699 = vmatprep.subr.bf16.mxu0 0
        %2700 = vmatpush1.bf16.msra.mxu0 0
        %2701 = vmatprep.subr.bf16.mxu0 0
        %2702 = vmatpush1.bf16.msra.mxu0 0
        %2703 = vmatprep.subr.bf16.mxu0 0
        %2704 = vmatpush1.bf16.msra.mxu0 0
        %2705 = vmatprep.subr.bf16.mxu0 0
        %2706 = vmatpush1.bf16.msra.mxu0 0
        %2707 = vmatprep.subr.bf16.mxu0 0
        %2708 = vmatpush1.bf16.msra.mxu0 0
        %2709 = vmatprep.subr.bf16.mxu0 0
        %2710 = vmatpush1.bf16.msra.mxu0 0
        %2711 = vmatprep.subr.bf16.mxu0 0
        %2712 = vmatpush1.bf16.msra.mxu0 0
        %2713 = vmatprep.subr.bf16.mxu0 0
        %2714 = vmatpush1.bf16.msra.mxu0 0
        %2715 = vmatprep.subr.bf16.mxu0 0
        %2716 = vmatpush1.bf16.msra.mxu0 0
        %2717 = vmatprep.subr.bf16.mxu0 0
        %2718 = vmatpush1.bf16.msra.mxu0 0
        %2719 = vmatprep.mubr.bf16.mxu0 0
        %2720 = vmatmul.mubr.bf16.gmra.mrb[0].mxu0 %v2640
        %v2721 = vpop.f32.mrb[0].mxu0
        %v2722 = vadd.f32 %v2625, %v2721
        %v2723 = vpop.f32.mrb[0].mxu0
        %v2724 = vpop.f32.mrb[0].mxu0
        %v2725 = vadd.f32 %v2625, %v2724
        %v2726 = vpop.f32.mrb[0].mxu0
        %2727 = vmatprep.mubr.bf16.mxu0 0
        %2728 = vmatmul.mubr.bf16.gmra.mrb[0].mxu0 %v2643
        %v2729 = vpop.f32.mrb[0].mxu0
        %v2730 = vadd.f32 %v2625, %v2729
        %v2731 = vpop.f32.mrb[0].mxu0
        %v2732 = vpop.f32.mrb[0].mxu0
        %v2733 = vadd.f32 %v2625, %v2732
        %v2734 = vpop.f32.mrb[0].mxu0
        %2735 = vmatprep.mubr.bf16.mxu0 0
        %2736 = vmatmul.mubr.bf16.gmra.mrb[0].mxu0 %v2646
        %v2737 = vpop.f32.mrb[0].mxu0
        %v2738 = vadd.f32 %v2625, %v2737
        %v2739 = vpop.f32.mrb[0].mxu0
        %v2740 = vpop.f32.mrb[0].mxu0
        %v2741 = vadd.f32 %v2625, %v2740
        %v2742 = vpop.f32.mrb[0].mxu0
        %2743 = vmatprep.mubr.bf16.mxu0 0
        %2744 = vmatmul.mubr.bf16.gmra.mrb[0].mxu0 %v2649
        %v2745 = vpop.f32.mrb[0].mxu0
        %v2746 = vadd.f32 %v2625, %v2745
        %v2747 = vpop.f32.mrb[0].mxu0
        %v2748 = vpop.f32.mrb[0].mxu0
        %v2749 = vadd.f32 %v2625, %v2748
        %v2750 = vpop.f32.mrb[0].mxu0
        %2751 = vmatprep.mubr.bf16.mxu0 0
        %2752 = vmatmul.mubr.bf16.gmra.mrb[0].mxu0 %v2652
        %v2753 = vpop.f32.mrb[0].mxu0
        %v2754 = vadd.f32 %v2625, %v2753
        %v2755 = vpop.f32.mrb[0].mxu0
        %v2756 = vpop.f32.mrb[0].mxu0
        %v2757 = vadd.f32 %v2625, %v2756
        %v2758 = vpop.f32.mrb[0].mxu0
        %2759 = vmatprep.mubr.bf16.mxu0 0
        %2760 = vmatmul.mubr.bf16.gmra.mrb[0].mxu0 %v2655
        %v2761 = vpop.f32.mrb[0].mxu0
        %v2762 = vadd.f32 %v2625, %v2761
        %v2763 = vpop.f32.mrb[0].mxu0
        %v2764 = vpop.f32.mrb[0].mxu0
        %v2765 = vadd.f32 %v2625, %v2764
        %v2766 = vpop.f32.mrb[0].mxu0
        %2767 = vmatprep.mubr.bf16.mxu0 0
        %2768 = vmatmul.mubr.bf16.gmra.mrb[0].mxu0 %v2658
        %v2769 = vpop.f32.mrb[0].mxu0
        %v2770 = vadd.f32 %v2625, %v2769
        %v2771 = vpop.f32.mrb[0].mxu0
        %v2772 = vpop.f32.mrb[0].mxu0
        %v2773 = vadd.f32 %v2625, %v2772
        %v2774 = vpop.f32.mrb[0].mxu0
        %2775 = vmatprep.mubr.bf16.mxu0 0
        %2776 = vmatmul.mubr.bf16.gmra.mrb[0].mxu0 %v2661
        %v2777 = vpop.f32.mrb[0].mxu0
        %v2778 = vadd.f32 %v2625, %v2777
        %v2779 = vpop.f32.mrb[0].mxu0
        %v2780 = vpop.f32.mrb[0].mxu0
        %v2781 = vadd.f32 %v2625, %v2780
        %v2782 = vpop.f32.mrb[0].mxu0
        %2783 = vmatprep.mubr.bf16.mxu0 0
        %2784 = vmatmul.mubr.bf16.gmra.mrb[0].mxu0 %v2664
        %v2785 = vpop.f32.mrb[0].mxu0
        %v2786 = vadd.f32 %v2625, %v2785
        %v2787 = vpop.f32.mrb[0].mxu0
        %v2788 = vpop.f32.mrb[0].mxu0
        %v2789 = vadd.f32 %v2625, %v2788
        %v2790 = vpop.f32.mrb[0].mxu0
        %2791 = vmatprep.mubr.bf16.mxu0 0
        %2792 = vmatmul.mubr.bf16.gmra.mrb[0].mxu0 %v2667
        %v2793 = vpop.f32.mrb[0].mxu0
        %v2794 = vadd.f32 %v2625, %v2793
        %v2795 = vpop.f32.mrb[0].mxu0
        %v2796 = vpop.f32.mrb[0].mxu0
        %v2797 = vadd.f32 %v2625, %v2796
        %v2798 = vpop.f32.mrb[0].mxu0
        %2799 = vmatprep.mubr.bf16.mxu0 0
        %2800 = vmatmul.mubr.bf16.gmra.mrb[0].mxu0 %v2670
        %v2801 = vpop.f32.mrb[0].mxu0
        %v2802 = vadd.f32 %v2625, %v2801
        %v2803 = vpop.f32.mrb[0].mxu0
        %v2804 = vpop.f32.mrb[0].mxu0
        %v2805 = vadd.f32 %v2625, %v2804
        %v2806 = vpop.f32.mrb[0].mxu0
        %2807 = vmatprep.mubr.bf16.mxu0 0
        %2808 = vmatmul.mubr.bf16.gmra.mrb[0].mxu0 %v2673
        %v2809 = vpop.f32.mrb[0].mxu0
        %v2810 = vadd.f32 %v2625, %v2809
        %v2811 = vpop.f32.mrb[0].mxu0
        %v2812 = vpop.f32.mrb[0].mxu0
        %v2813 = vadd.f32 %v2625, %v2812
        %v2814 = vpop.f32.mrb[0].mxu0
        %2815 = vmatprep.mubr.bf16.mxu0 0
        %2816 = vmatmul.mubr.bf16.gmra.mrb[0].mxu0 %v2676
        %v2817 = vpop.f32.mrb[0].mxu0
        %v2818 = vadd.f32 %v2625, %v2817
        %v2819 = vpop.f32.mrb[0].mxu0
        %v2820 = vpop.f32.mrb[0].mxu0
        %v2821 = vadd.f32 %v2625, %v2820
        %v2822 = vpop.f32.mrb[0].mxu0
        %2823 = vmatprep.mubr.bf16.mxu0 0
        %2824 = vmatmul.mubr.bf16.gmra.mrb[0].mxu0 %v2679
        %v2825 = vpop.f32.mrb[0].mxu0
        %v2826 = vadd.f32 %v2625, %v2825
        %v2827 = vpop.f32.mrb[0].mxu0
        %v2828 = vpop.f32.mrb[0].mxu0
        %v2829 = vadd.f32 %v2625, %v2828
        %v2830 = vpop.f32.mrb[0].mxu0
        %2831 = vmatprep.mubr.bf16.mxu0 0
        %2832 = vmatmul.mubr.bf16.gmra.mrb[0].mxu0 %v2682
        %v2833 = vpop.f32.mrb[0].mxu0
        %v2834 = vadd.f32 %v2625, %v2833
        %v2835 = vpop.f32.mrb[0].mxu0
        %v2836 = vpop.f32.mrb[0].mxu0
        %v2837 = vadd.f32 %v2625, %v2836
        %v2838 = vpop.f32.mrb[0].mxu0
        %2839 = vmatprep.mubr.bf16.mxu0 0
        %2840 = vmatmul.mubr.bf16.gmra.mrb[0].mxu0 %v2685
        %v2841 = vpop.f32.mrb[0].mxu0
        %v2842 = vadd.f32 %v2625, %v2841
        %v2843 = vpop.f32.mrb[0].mxu0
        %v2844 = vpop.f32.mrb[0].mxu0
        %v2845 = vadd.f32 %v2625, %v2844
        %v2846 = vpop.f32.mrb[0].mxu0
        %2847 = vdwg.mxu0
        %v2848 = vmax.f32 %v2722, 0.0
        %v2849 = vmax.f32 %v2725, 0.0
        %v2850 = vmax.f32 %v2730, 0.0
        %v2851 = vmax.f32 %v2733, 0.0
        %v2852 = vmax.f32 %v2738, 0.0
        %v2853 = vmax.f32 %v2741, 0.0
        %v2854 = vmax.f32 %v2746, 0.0
        %v2855 = vmax.f32 %v2749, 0.0
        %v2856 = vmax.f32 %v2754, 0.0
        %v2857 = vmax.f32 %v2757, 0.0
        %v2858 = vmax.f32 %v2762, 0.0
        %v2859 = vmax.f32 %v2765, 0.0
        %v2860 = vmax.f32 %v2770, 0.0
        %v2861 = vmax.f32 %v2773, 0.0
        %v2862 = vmax.f32 %v2778, 0.0
        %v2863 = vmax.f32 %v2781, 0.0
        %v2864 = vmax.f32 %v2786, 0.0
        %v2865 = vmax.f32 %v2789, 0.0
        %v2866 = vmax.f32 %v2794, 0.0
        %v2867 = vmax.f32 %v2797, 0.0
        %v2868 = vmax.f32 %v2802, 0.0
        %v2869 = vmax.f32 %v2805, 0.0
        %v2870 = vmax.f32 %v2810, 0.0
        %v2871 = vmax.f32 %v2813, 0.0
        %v2872 = vmax.f32 %v2818, 0.0
        %v2873 = vmax.f32 %v2821, 0.0
        %v2874 = vmax.f32 %v2826, 0.0
        %v2875 = vmax.f32 %v2829, 0.0
        %v2876 = vmax.f32 %v2834, 0.0
        %v2877 = vmax.f32 %v2837, 0.0
        %v2878 = vmax.f32 %v2842, 0.0
        %v2879 = vmax.f32 %v2845, 0.0
        %v2880 = vld [vmem:[%s17] sm:$0x1]
        %v2881 = vld [vmem:[#allocation2] sm:$0x1]
        %v2882 = vpack.c.bf16 %v2849, %v2848
        %v2883 = vpack.c.bf16 %v2851, %v2850
        %v2884 = vpack.c.bf16 %v2853, %v2852
        %v2885 = vpack.c.bf16 %v2855, %v2854
        %v2886 = vpack.c.bf16 %v2857, %v2856
        %v2887 = vpack.c.bf16 %v2859, %v2858
        %v2888 = vpack.c.bf16 %v2861, %v2860
        %v2889 = vpack.c.bf16 %v2863, %v2862
        %v2890 = vpack.c.bf16 %v2865, %v2864
        %v2891 = vpack.c.bf16 %v2867, %v2866
        %v2892 = vpack.c.bf16 %v2869, %v2868
        %v2893 = vpack.c.bf16 %v2871, %v2870
        %v2894 = vpack.c.bf16 %v2873, %v2872
        %v2895 = vpack.c.bf16 %v2875, %v2874
        %v2896 = vpack.c.bf16 %v2877, %v2876
        %v2897 = vpack.c.bf16 %v2879, %v2878
        %2899 = vset.pattern.permute.xlu0 0
        %2900 = vperm.xlu0 %2899, %v2881
        %v2901 = vpop.permute.xlu0 %2900
        %v2903 = vlaneseq
        %v2904 = vshrl.u32 %v2903, 7
        %v2905 = vsub.s32 0, %v2904
        %v2906 = vrot.slane %v2901, %v2905
        %v2908 = vsel %vm678, %v2880, 0
        %v2911 = vsel %vm678, %v2882, 0
        %v2914 = vsel %vm678, %v2883, 0
        %v2917 = vsel %vm678, %v2884, 0
        %v2920 = vsel %vm678, %v2885, 0
        %v2923 = vsel %vm678, %v2886, 0
        %v2926 = vsel %vm678, %v2887, 0
        %v2929 = vsel %vm678, %v2888, 0
        %v2932 = vsel %vm678, %v2889, 0
        %v2935 = vsel %vm678, %v2890, 0
        %v2938 = vsel %vm678, %v2891, 0
        %v2941 = vsel %vm678, %v2892, 0
        %v2944 = vsel %vm678, %v2893, 0
        %v2947 = vsel %vm678, %v2894, 0
        %v2950 = vsel %vm678, %v2895, 0
        %v2953 = vsel %vm678, %v2896, 0
        %v2956 = vsel %vm678, %v2897, 0
        %2958 = vmatprep.subr.bf16.mxu0 0
        %2959 = vmatpush1.bf16.xpose.msra.mxu0 %v2911
        %2960 = vmatprep.subr.bf16.mxu0 0
        %2961 = vmatpush1.bf16.xpose.msra.mxu0 %v2914
        %2962 = vmatprep.subr.bf16.mxu0 0
        %2963 = vmatpush1.bf16.xpose.msra.mxu0 %v2917
        %2964 = vmatprep.subr.bf16.mxu0 0
        %2965 = vmatpush1.bf16.xpose.msra.mxu0 %v2920
        %2966 = vmatprep.subr.bf16.mxu0 0
        %2967 = vmatpush1.bf16.xpose.msra.mxu0 %v2923
        %2968 = vmatprep.subr.bf16.mxu0 0
        %2969 = vmatpush1.bf16.xpose.msra.mxu0 %v2926
        %2970 = vmatprep.subr.bf16.mxu0 0
        %2971 = vmatpush1.bf16.xpose.msra.mxu0 %v2929
        %2972 = vmatprep.subr.bf16.mxu0 0
        %2973 = vmatpush1.bf16.xpose.msra.mxu0 %v2932
        %2974 = vmatprep.subr.bf16.mxu0 0
        %2975 = vmatpush1.bf16.xpose.msra.mxu0 %v2935
        %2976 = vmatprep.subr.bf16.mxu0 0
        %2977 = vmatpush1.bf16.xpose.msra.mxu0 %v2938
        %2978 = vmatprep.subr.bf16.mxu0 0
        %2979 = vmatpush1.bf16.xpose.msra.mxu0 %v2941
        %2980 = vmatprep.subr.bf16.mxu0 0
        %2981 = vmatpush1.bf16.xpose.msra.mxu0 %v2944
        %2982 = vmatprep.subr.bf16.mxu0 0
        %2983 = vmatpush1.bf16.xpose.msra.mxu0 %v2947
        %2984 = vmatprep.subr.bf16.mxu0 0
        %2985 = vmatpush1.bf16.xpose.msra.mxu0 %v2950
        %2986 = vmatprep.subr.bf16.mxu0 0
        %2987 = vmatpush1.bf16.xpose.msra.mxu0 %v2953
        %2988 = vmatprep.subr.bf16.mxu0 0
        %2989 = vmatpush1.bf16.xpose.msra.mxu0 %v2956
        %2990 = vmatprep.mubr.bf16.mxu0 0
        %2991 = vmatmul.mubr.bf16.gmra.mrb[0].mxu0 %v2908
        %v2992 = vpop.f32.mrb[0].mxu0
        %v2993 = vadd.f32 %v2906, %v2992
        %v2994 = vpop.f32.mrb[0].mxu0
        %v2995 = vadd.f32 %v2906, %v2994
        %v2996 = vpop.f32.mrb[0].mxu0
        %v2997 = vpop.f32.mrb[0].mxu0
        %2998 = vdwg.mxu0
        %v2999 = vtanh.pop %v2993
        %v3000 = vtanh.pop %v2995
        %v3003 = vcombine.low %v2999, %v3000
        %v3005 = vunpack.c.l.s4 1966171168
        %v3006 = vunpack.c.0.s8 %v3005
        %v3007 = vlaneseq
        %v3008 = vshrl.u32 %v3007, 7
        %v3009 = vsub.s32 %v3006, %v3008
        %v3010 = vrot.slane %v3003, %v3009
        %v3012 = vunpack.c.l.s4 1966171168
        %v3013 = vunpack.c.0.s8 %v3012
        %v3014 = vlaneseq
        %v3015 = vshrl.u32 %v3014, 7
        %v3016 = vsub.s32 %v3013, %v3015
        %v3017 = vrot.slane %v3010, %v3016
        %v3019 = vlaneseq
        %vm3020 = vcmp.ge.s32.totalorder %v3019, 0
        %vm3021 = vcmp.lt.s32.totalorder %v3019, 256
        %vm3022 = vmand %vm3020, %vm3021
        %3023 = vst.msk [vmem:[%s598] sm:$0x3] %vm3022, %v3017
        %s3024 = sand.u32 %s447, 1
        %s3025 = scalar_lea.sflag [#allocation4], %s3024
        %s3026 = sand.u32 %s447, 1
        %s3027 = smul.addr %s3026, 2
        %s3028 = scalar_lea.vmem [#allocation3], %s3027
        // Predicated region
        $region97: #{tpu_custom_call.1} parent=95 // pred_check
          %p3029 = pneg %p457
        $region98: #{tpu_custom_call.1} parent=95 // pred_check_branch
          %3031 = sbr.rel (%p3029) target = $region100
        $region99: #{tpu_custom_call.1} parent=95 // pred_region
          %s3032 = smul.u32 2, %s35
          %s3034 = ssub.s32 32, 32
          %3035 = vsyncadd %s3025, %s3034
          %s3036 = smul.addr %s3032, 16
          %s3037 = scalar_lea.hbm %s19, %s3036
          %s3039 = sshll.u32 %s3028, 4
          %s3040 = int_to_ptr.vmem [resolvable:$true] %s3039
          %3042 = dma.vmem_to_hbm [thread:$0]  %s3040, 32, %s3037, %s3025
        $region100: #{tpu_custom_call.1} parent=95 // pred_fallthru
          _
      $region96: #{tpu_custom_call.1} parent=5 // pred_fallthru
        _
      %p3043 = scmp.le.s32.totalorder 2, %s30
      // Predicated region
      $region101: #{tpu_custom_call.1} parent=5 // pred_check
        %p3044 = pneg %p3043
      $region102: #{tpu_custom_call.1} parent=5 // pred_check_branch
        %3046 = sbr.rel (%p3044) target = $region104
      $region103: #{tpu_custom_call.1} parent=5 // pred_region
        %s3047 = ssub.s32 %s30, 2
        // Predicated region
        $region105: #{tpu_custom_call.1} parent=103 // pred_check
          %p3048 = pneg %p463
        $region106: #{tpu_custom_call.1} parent=103 // pred_check_branch
          %3050 = sbr.rel (%p3048) target = $region108
        $region107: #{tpu_custom_call.1} parent=103 // pred_region
          %s3051 = sand.u32 %s448, 1
          %s3052 = scalar_lea.sflag [#allocation4], %s3051
          %s3053 = sand.u32 %s448, 1
          %s3054 = smul.addr %s3053, 2
          %s3055 = scalar_lea.vmem [#allocation3], %s3054
          %3056 = dma.done %s3052, 32
        $region108: #{tpu_custom_call.1} parent=103 // pred_fallthru
          _
      $region104: #{tpu_custom_call.1} parent=5 // pred_fallthru
        _
    $region6: #{tpu_custom_call.1} parent=1 // loop_footer
      %s34 = sadd.s32 1, %s30
    $region7: #{tpu_custom_call.1} parent=1 // loop_footer_branch
      %29 = sbr.rel target = $region3
    $region8: #{tpu_custom_call.1} parent=1 // loop_exit
      _
    %3057 = vsyncpa [#allocation4], 1
    %s3058 = scalar_lea.sflag [#allocation4], 1
    %3059 = vsyncpa %s3058, 1

</llo_original>
